<compile_context>
chip_gen: v5e
topology: v5e:2x2
jax: 0.10.0
libtpu: 0.0.40
codegen_flags: <defaults>
</compile_context>

<pallas_src>
import functools

import jax
import jax.numpy as jnp
from jax.experimental import pallas as pl
from jax.experimental.pallas import tpu as pltpu


# ----------------------------------------------------------------------------
# tiling helpers
# ----------------------------------------------------------------------------
def _pick_batch_block(nb, max_bb):
    for bb in range(min(nb, max_bb), 0, -1):
        if nb % bb == 0:
            return bb
    return 1


def _pick_v_tile(vocab, max_v_tile):
    if vocab <= max_v_tile:
        return vocab
    for t in (max_v_tile, 8192, 4096, 2048, 1024, 512, 256, 128):
        if t <= max_v_tile and vocab % t == 0:
            return t
    # TODO(synk): ragged V (not a multiple of 128) needs -inf/0 masking of the
    # last tile inside the streaming softmax; fall back to one full-V block.
    return vocab


# ----------------------------------------------------------------------------
# kernel
# ----------------------------------------------------------------------------
def _map_kl_kernel(
    pos_d_ref, neg_d_ref, pos_l_ref, neg_l_ref, pos_e_ref, neg_e_ref, idf_ref,
    out_ref,
    mt_ref, zt_ref, mp_ref, zp_ref, s_ref,
    *, map_method, dense_dim,
):
    """One (batch-block, vocab-tile) step of fused map_builder + streaming KL.

    pos/neg dense  : (BB, D, L)    bf16/f32 (pre-transposed: MXU contracts L)
    pos/neg logits : (BB, L, Vt)   bf16/f32
    pos/neg emb    : (BB, 1, Vt)
    idf            : (1, 1, Vt)    f32 normalized idf
    out            : (1, 8, 128)   per-batch-block KL partial (pos+neg summed),
                                   resident across the V grid axis
    scratch        : 5 x (2*BB, 1) f32 running softmax stats
                     rows [0:BB]=pos, [BB:2BB]=neg
    """
    v_idx = pl.program_id(1)
    nv = pl.num_programs(1)

    @pl.when(v_idx == 0)
    def _init():
        mt_ref[...] = jnp.full_like(mt_ref, -jnp.inf)
        mp_ref[...] = jnp.full_like(mp_ref, -jnp.inf)
        zt_ref[...] = jnp.zeros_like(zt_ref)
        zp_ref[...] = jnp.zeros_like(zp_ref)
        s_ref[...] = jnp.zeros_like(s_ref)

    if map_method not in ("max", "mean", "sum"):
        raise NotImplementedError(map_method)

    def build_pred(d_ref, l_ref):
        logits = l_ref[...]                               # (BB, L, Vt)
        if map_method == "max":
            # 'b l d, b l s -> b d s' (dense pre-transposed) then amax over d.
            m = jnp.einsum(
                "bdl,blv->bdv", d_ref[...], logits,
                preferred_element_type=jnp.float32,
            )                                             # (BB, D, Vt) f32
            return jnp.max(m, axis=1)                     # (BB, Vt)
        # sum/mean collapse: sum_d m[b,d,v] = sum_l (sum_d dense[b,l,d]) * logits[b,l,v]
        w = jnp.sum(d_ref[...].astype(jnp.float32), axis=1)                 # (BB, L)
        pred = jnp.sum(w[:, :, None] * logits.astype(jnp.float32), axis=1)  # (BB, Vt)
        if map_method == "mean":
            pred = pred * (1.0 / dense_dim)
        return pred

    idf_row = idf_ref[...][0].astype(jnp.float32)         # (1, Vt)

    pred = jnp.concatenate(
        [build_pred(pos_d_ref, pos_l_ref), build_pred(neg_d_ref, neg_l_ref)],
        axis=0)                                           # (2BB, Vt) f32
    target = jnp.concatenate(
        [idf_row * pos_e_ref[...][:, 0, :].astype(jnp.float32),
         idf_row * neg_e_ref[...][:, 0, :].astype(jnp.float32)],
        axis=0)                                           # (2BB, Vt) f32

    # streaming log-softmax stats for pred (student map)
    mp_new = jnp.maximum(mp_ref[...], jnp.max(pred, axis=-1, keepdims=True))
    zp_ref[...] = (zp_ref[...] * jnp.exp(mp_ref[...] - mp_new)
                   + jnp.sum(jnp.exp(pred - mp_new), axis=-1, keepdims=True))
    mp_ref[...] = mp_new

    # streaming log-softmax stats for target + S = sum_v exp(t-Mt)*(t-p)
    mt_new = jnp.maximum(mt_ref[...], jnp.max(target, axis=-1, keepdims=True))
    alpha_t = jnp.exp(mt_ref[...] - mt_new)
    e_t = jnp.exp(target - mt_new)
    zt_ref[...] = zt_ref[...] * alpha_t + jnp.sum(e_t, axis=-1, keepdims=True)
    s_ref[...] = s_ref[...] * alpha_t + jnp.sum(e_t * (target - pred), axis=-1,
                                                keepdims=True)
    mt_ref[...] = mt_new

    @pl.when(v_idx == nv - 1)
    def _finalize():
        zt = zt_ref[...]
        # KL(softmax(t) || softmax(p)) per row = S/Zt - (Mt + log Zt) + (Mp + log Zp)
        kl_rows = (s_ref[...] / zt
                   - (mt_ref[...] + jnp.log(zt))
                   + (mp_ref[...] + jnp.log(zp_ref[...])))        # (2BB, 1)
        out_ref[0] = jnp.full((8, 128), jnp.sum(kl_rows), dtype=jnp.float32)


# ----------------------------------------------------------------------------
# wrapper
# ----------------------------------------------------------------------------
def _fused_map_kl_sum(pos_dense, neg_dense, pos_logits, neg_logits,
                      pos_emb, neg_emb, idf_norm, *, map_method,
                      block_batch=None, max_batch_block=4, max_v_tile=1024):
    """sum over all rows (pos AND neg) of KL(softmax(idf*emb) || softmax(map)).

    Single pallas_call; grid = (batch_blocks [parallel], vocab_tiles [arbitrary]).
    No wrapper-side casts of the big tensors (bf16 stays bf16 on the DMA path).
    Per-generation sizing: raise max_v_tile (v6e, 128 MiB VMEM) or lower it
    (v7x 64 MiB / v5e 16 MiB scoped default); v_tile is always a multiple of 128.
    """
    nb, seq_len, dense_dim = pos_dense.shape
    vocab = pos_logits.shape[-1]
    assert neg_dense.shape == pos_dense.shape
    assert pos_logits.shape == (nb, seq_len, vocab) == neg_logits.shape
    assert pos_emb.shape == (nb, vocab) == neg_emb.shape

    bb = block_batch if block_batch is not None else _pick_batch_block(nb, max_batch_block)
    assert nb % bb == 0, "batch block must divide batch"
    v_tile = _pick_v_tile(vocab, max_v_tile)
    assert vocab % v_tile == 0
    nbb = nb // bb
    nv = vocab // v_tile

    # One XLA transpose outside the kernel (on the small (B,L,D) tensor) so the
    # in-kernel matmul contracts the last (L) axis of the LHS with no per-step
    # XLU transpose of the dense tile.
    pos_dense_t = jnp.swapaxes(pos_dense, 1, 2)   # (NB, D, L)
    neg_dense_t = jnp.swapaxes(neg_dense, 1, 2)
    pos_emb3 = pos_emb.reshape(nb, 1, vocab)
    neg_emb3 = neg_emb.reshape(nb, 1, vocab)
    idf3 = idf_norm.astype(jnp.float32).reshape(1, 1, vocab)

    def nbytes(x):
        return int(x.size) * x.dtype.itemsize

    if map_method == "max":
        flops = 2 * (2 * nb * dense_dim * seq_len * vocab) + 2 * (2 * nb * dense_dim * vocab)
    else:
        flops = 2 * (nb * seq_len * dense_dim + 2 * nb * seq_len * vocab)
    flops += 12 * nb * vocab  # softmax / KL elementwise
    cost = pl.CostEstimate(
        flops=int(flops),
        transcendentals=int(4 * nb * vocab),
        bytes_accessed=int(sum(nbytes(x) for x in (
            pos_dense_t, neg_dense_t, pos_logits, neg_logits,
            pos_emb3, neg_emb3, idf3)) + nbb * 8 * 128 * 4),
    )

    # dense index_map is constant along the vocab axis -> block stays resident
    # in VMEM across all vocab tiles of a batch block (no re-DMA per tile).
    dense_spec = pl.BlockSpec((bb, dense_dim, seq_len), lambda b, v: (b, 0, 0))
    logits_spec = pl.BlockSpec((bb, seq_len, v_tile), lambda b, v: (b, 0, v))
    emb_spec = pl.BlockSpec((bb, 1, v_tile), lambda b, v: (b, 0, v))
    idf_spec = pl.BlockSpec((1, 1, v_tile), lambda b, v: (0, 0, v))

    out = pl.pallas_call(
        functools.partial(_map_kl_kernel, map_method=map_method, dense_dim=dense_dim),
        out_shape=jax.ShapeDtypeStruct((nbb, 8, 128), jnp.float32),
        grid_spec=pltpu.PrefetchScalarGridSpec(
            num_scalar_prefetch=0,
            grid=(nbb, nv),
            in_specs=[dense_spec, dense_spec, logits_spec, logits_spec,
                      emb_spec, emb_spec, idf_spec],
            out_specs=pl.BlockSpec((1, 8, 128), lambda b, v: (b, 0, 0)),
            scratch_shapes=[
                pltpu.VMEM((2 * bb, 1), jnp.float32),   # mt (target running max)
                pltpu.VMEM((2 * bb, 1), jnp.float32),   # zt (target running denom)
                pltpu.VMEM((2 * bb, 1), jnp.float32),   # mp (pred running max)
                pltpu.VMEM((2 * bb, 1), jnp.float32),   # zp (pred running denom)
                pltpu.VMEM((2 * bb, 1), jnp.float32),   # s  (cross term)
            ],
        ),
        compiler_params=pltpu.CompilerParams(
            dimension_semantics=("parallel", "arbitrary"),
        ),
        cost_estimate=cost,
    )(pos_dense_t, neg_dense_t, pos_logits, neg_logits, pos_emb3, neg_emb3, idf3)

    return jnp.sum(out[:, 0, 0])


def dense2sparse_semantic_idf_forward(
    query_emb,
    pos_pas_emb,
    neg_pas_emb,
    teacher_query_emb,
    teacher_pos_pas_emb,
    teacher_neg_pas_emb,
    pos_score_res,
    neg_score_res,
    label,
    *,
    idf_norm,
    map_method="max",
    scale_margin_mse=1.0,
    block_batch=None,
    max_v_tile=1024,
):
    pred_pos = pos_score_res["relevance"]
    pred_neg = neg_score_res["relevance"]

    # MarginMSE: MSE(pred_pos - pred_neg, target_margin) * scale  (tiny glue op)
    target_margin = label["margin"]
    margin_mse_loss = scale_margin_mse * jnp.mean(
        (pred_pos - pred_neg - target_margin) ** 2)

    batch = pos_pas_emb["encoded_matrix"].shape[0]
    kl_sum = _fused_map_kl_sum(
        pos_pas_emb["encoded_matrix"],
        neg_pas_emb["encoded_matrix"],
        teacher_pos_pas_emb["encoded_logits"],
        teacher_neg_pas_emb["encoded_logits"],
        teacher_pos_pas_emb["encoded_embeddings"],
        teacher_neg_pas_emb["encoded_embeddings"],
        idf_norm,
        map_method=map_method,
        block_batch=block_batch,
        max_v_tile=max_v_tile,
    )
    # pos batchmean + neg batchmean == (sum of all per-row KLs) / B
    map_loss = kl_sum / batch

    losses = {"student_loss": margin_mse_loss, "map_loss": map_loss}
    losses["loss"] = losses["student_loss"] + losses["map_loss"]
    return losses


# ----------------------------------------------------------------------------
# demo / self-check
# ----------------------------------------------------------------------------
if __name__ == "__main__":
    B, L, D, V = 4, 8, 32, 256  # batch, seq_len, dense_dim, sparse_vocab
    key = jax.random.PRNGKey(0)
    keys = jax.random.split(key, 10)

    # Deterministic synthetic "idf table" (replaces json.load(idf_path)).
    idf = jax.random.uniform(keys[0], (V,), jnp.float32, minval=0.5, maxval=10.0)
    idf_norm = (idf - jnp.mean(idf)) / jnp.std(idf, ddof=1)  # torch.std is unbiased

    # Student/teacher activations kept in bf16 (no wrapper-side f32 casts);
    # the kernel accumulates in f32.
    pos_dense = jax.random.normal(keys[1], (B, L, D), jnp.float32).astype(jnp.bfloat16)
    neg_dense = jax.random.normal(keys[2], (B, L, D), jnp.float32).astype(jnp.bfloat16)
    pos_logits = jax.random.normal(keys[3], (B, L, V), jnp.float32).astype(jnp.bfloat16)
    neg_logits = jax.random.normal(keys[5], (B, L, V), jnp.float32).astype(jnp.bfloat16)
    pos_emb = jax.nn.relu(jax.random.normal(keys[4], (B, V), jnp.float32))
    neg_emb = jax.nn.relu(jax.random.normal(keys[6], (B, V), jnp.float32))

    pos_pas_emb = {"encoded_matrix": pos_dense}
    neg_pas_emb = {"encoded_matrix": neg_dense}
    teacher_pos_pas_emb = {"encoded_logits": pos_logits, "encoded_embeddings": pos_emb}
    teacher_neg_pas_emb = {"encoded_logits": neg_logits, "encoded_embeddings": neg_emb}
    pos_score_res = {"relevance": jax.random.normal(keys[7], (B,), jnp.float32)}
    neg_score_res = {"relevance": jax.random.normal(keys[8], (B,), jnp.float32)}
    label = {"margin": jax.random.normal(keys[9], (B,), jnp.float32)}

    # Pure-JAX reference of map_builder + KLDivLoss (batchmean), for validation.
    def ref_map_kl(dense, logits, emb, method):
        d = dense.astype(jnp.float32)
        s = logits.astype(jnp.float32)
        m = jnp.einsum("bld,blv->bdv", d, s)
        if method == "max":
            pred = jnp.max(m, axis=1)
        elif method == "mean":
            pred = jnp.mean(m, axis=1)
        else:
            pred = jnp.sum(m, axis=1)
        target = idf_norm[None, :] * emb.astype(jnp.float32)
        log_p = jax.nn.log_softmax(pred, axis=-1)
        log_t = jax.nn.log_softmax(target, axis=-1)
        t = jnp.exp(log_t)
        return jnp.sum(t * (log_t - log_p)) / dense.shape[0]

    ref_student = jnp.mean((pos_score_res["relevance"] - neg_score_res["relevance"]
                            - label["margin"]) ** 2)

    ok = True
    for method in ("max", "sum"):  # exercises both the MXU and the GEMV-collapse path
        losses = dense2sparse_semantic_idf_forward(
            {},  # query_emb (unused in forward)
            pos_pas_emb,
            neg_pas_emb,
            {},  # teacher_query_emb (unused in forward)
            teacher_pos_pas_emb,
            teacher_neg_pas_emb,
            pos_score_res,
            neg_score_res,
            label,
            idf_norm=idf_norm,
            map_method=method,
            block_batch=2,    # -> 2 batch blocks: exercises the "parallel" axis
            max_v_tile=128,   # -> 2 vocab tiles: exercises the streaming softmax
        )
        losses = jax.tree_util.tree_map(jax.block_until_ready, losses)

        ref_map = (ref_map_kl(pos_dense, pos_logits, pos_emb, method)
                   + ref_map_kl(neg_dense, neg_logits, neg_emb, method))
        ok &= all(bool(jnp.isfinite(v)) for v in losses.values())
        ok &= bool(jnp.allclose(losses["map_loss"], ref_map, rtol=1e-2, atol=1e-3))
        ok &= bool(jnp.allclose(losses["student_loss"], ref_student, rtol=1e-5, atol=1e-6))

    assert ok, "Pallas kernel output mismatch vs pure-JAX reference"
    print("KERNEL_OK")
</pallas_src>

<mosaic_0001>
module attributes {stable_mosaic.version = 11 : i64} {
  func.func @_map_kl_kernel(%arg0: i32, %arg1: i32, %arg2: memref<2x32x8xbf16, #tpu.memory_space<vmem>>, %arg3: memref<2x32x8xbf16, #tpu.memory_space<vmem>>, %arg4: memref<2x8x128xbf16, #tpu.memory_space<vmem>>, %arg5: memref<2x8x128xbf16, #tpu.memory_space<vmem>>, %arg6: memref<2x1x128xf32, #tpu.memory_space<vmem>>, %arg7: memref<2x1x128xf32, #tpu.memory_space<vmem>>, %arg8: memref<1x1x128xf32, #tpu.memory_space<vmem>>, %arg9: memref<1x8x128xf32, #tpu.memory_space<vmem>>, %arg10: memref<4x1xf32, #tpu.memory_space<vmem>>, %arg11: memref<4x1xf32, #tpu.memory_space<vmem>>, %arg12: memref<4x1xf32, #tpu.memory_space<vmem>>, %arg13: memref<4x1xf32, #tpu.memory_space<vmem>>, %arg14: memref<4x1xf32, #tpu.memory_space<vmem>>) attributes {dimension_semantics = [#tpu.dimension_semantics<parallel>, #tpu.dimension_semantics<arbitrary>], iteration_bounds = array<i64: 2, 2>, scalar_prefetch = 0 : i64, scratch_operands = 5 : i64, tpu.core_type = #tpu.core_type<tc>, window_params = [{transform_indices = @transform_0, window_bounds = array<i64: 2, 32, 8>}, {transform_indices = @transform_1, window_bounds = array<i64: 2, 32, 8>}, {transform_indices = @transform_2, window_bounds = array<i64: 2, 8, 128>}, {transform_indices = @transform_3, window_bounds = array<i64: 2, 8, 128>}, {transform_indices = @transform_4, window_bounds = array<i64: 2, 1, 128>}, {transform_indices = @transform_5, window_bounds = array<i64: 2, 1, 128>}, {transform_indices = @transform_6, window_bounds = array<i64: 1, 1, 128>}, {transform_indices = @transform_7, window_bounds = array<i64: 1, 8, 128>}]} {
    %c0_i32 = arith.constant 0 : i32
    %0 = arith.cmpi eq, %arg1, %c0_i32 : i32
    %1 = arith.extui %0 : i1 to i32
    %c0_i32_0 = arith.constant 0 : i32
    %2 = arith.cmpi ne, %1, %c0_i32_0 : i32
    scf.if %2 {
      %cst_54 = arith.constant 0xFF800000 : f32
      %68 = vector.broadcast %cst_54 : f32 to vector<4x1xf32>
      %c0_55 = arith.constant 0 : index
      %c0_56 = arith.constant 0 : index
      %69 = vector.load %arg10[%c0_55, %c0_56] : memref<4x1xf32, #tpu.memory_space<vmem>>, vector<4x1xf32>
      tpu.vector_store %arg10[%c0_55, %c0_56], %68 {strides = array<i32>} : memref<4x1xf32, #tpu.memory_space<vmem>>, vector<4x1xf32>,
      %cst_57 = arith.constant 0xFF800000 : f32
      %70 = vector.broadcast %cst_57 : f32 to vector<4x1xf32>
      %c0_58 = arith.constant 0 : index
      %c0_59 = arith.constant 0 : index
      %71 = vector.load %arg12[%c0_58, %c0_59] : memref<4x1xf32, #tpu.memory_space<vmem>>, vector<4x1xf32>
      tpu.vector_store %arg12[%c0_58, %c0_59], %70 {strides = array<i32>} : memref<4x1xf32, #tpu.memory_space<vmem>>, vector<4x1xf32>,
      %cst_60 = arith.constant 0.000000e+00 : f32
      %72 = vector.broadcast %cst_60 : f32 to vector<4x1xf32>
      %c0_61 = arith.constant 0 : index
      %c0_62 = arith.constant 0 : index
      %73 = vector.load %arg11[%c0_61, %c0_62] : memref<4x1xf32, #tpu.memory_space<vmem>>, vector<4x1xf32>
      tpu.vector_store %arg11[%c0_61, %c0_62], %72 {strides = array<i32>} : memref<4x1xf32, #tpu.memory_space<vmem>>, vector<4x1xf32>,
      %cst_63 = arith.constant 0.000000e+00 : f32
      %74 = vector.broadcast %cst_63 : f32 to vector<4x1xf32>
      %c0_64 = arith.constant 0 : index
      %c0_65 = arith.constant 0 : index
      %75 = vector.load %arg13[%c0_64, %c0_65] : memref<4x1xf32, #tpu.memory_space<vmem>>, vector<4x1xf32>
      tpu.vector_store %arg13[%c0_64, %c0_65], %74 {strides = array<i32>} : memref<4x1xf32, #tpu.memory_space<vmem>>, vector<4x1xf32>,
      %cst_66 = arith.constant 0.000000e+00 : f32
      %76 = vector.broadcast %cst_66 : f32 to vector<4x1xf32>
      %c0_67 = arith.constant 0 : index
      %c0_68 = arith.constant 0 : index
      %77 = vector.load %arg14[%c0_67, %c0_68] : memref<4x1xf32, #tpu.memory_space<vmem>>, vector<4x1xf32>
      tpu.vector_store %arg14[%c0_67, %c0_68], %76 {strides = array<i32>} : memref<4x1xf32, #tpu.memory_space<vmem>>, vector<4x1xf32>,
    } else {
    }
    %c0 = arith.constant 0 : index
    %c0_1 = arith.constant 0 : index
    %c0_2 = arith.constant 0 : index
    %3 = vector.load %arg8[%c0, %c0_1, %c0_2] : memref<1x1x128xf32, #tpu.memory_space<vmem>>, vector<1x1x128xf32>
    %4 = vector.shape_cast %3 : vector<1x1x128xf32> to vector<1x128xf32>
    %c0_3 = arith.constant 0 : index
    %c0_4 = arith.constant 0 : index
    %c0_5 = arith.constant 0 : index
    %5 = vector.load %arg4[%c0_3, %c0_4, %c0_5] : memref<2x8x128xbf16, #tpu.memory_space<vmem>>, vector<2x8x128xbf16>
    %c0_6 = arith.constant 0 : index
    %c0_7 = arith.constant 0 : index
    %c0_8 = arith.constant 0 : index
    %6 = vector.load %arg2[%c0_6, %c0_7, %c0_8] : memref<2x32x8xbf16, #tpu.memory_space<vmem>>, vector<2x32x8xbf16>
    "tpu.trace_start"() <{level = 10 : i32, message = "bdl,blv->bdv"}> : () -> ()
    %cst = arith.constant dense<0.000000e+00> : vector<2x32x128xf32>
    %7 = tpu.matmul %6, %5, %cst {dimension_numbers = #tpu.dot_dimension_numbers<[2], [1], [1], [2], [0, 0, 0, 1, 1, 2], [0], [0]>} : vector<2x32x8xbf16>, vector<2x8x128xbf16>, vector<2x32x128xf32> -> vector<2x32x128xf32>
    "tpu.trace_stop"() : () -> ()
    %cst_9 = arith.constant dense<0xFF800000> : vector<2x128xf32>
    %8 = vector.multi_reduction <maximumf>, %7, %cst_9 [1] : vector<2x32x128xf32> to vector<2x128xf32>
    %c0_10 = arith.constant 0 : index
    %c0_11 = arith.constant 0 : index
    %c0_12 = arith.constant 0 : index
    %9 = vector.load %arg5[%c0_10, %c0_11, %c0_12] : memref<2x8x128xbf16, #tpu.memory_space<vmem>>, vector<2x8x128xbf16>
    %c0_13 = arith.constant 0 : index
    %c0_14 = arith.constant 0 : index
    %c0_15 = arith.constant 0 : index
    %10 = vector.load %arg3[%c0_13, %c0_14, %c0_15] : memref<2x32x8xbf16, #tpu.memory_space<vmem>>, vector<2x32x8xbf16>
    "tpu.trace_start"() <{level = 10 : i32, message = "bdl,blv->bdv"}> : () -> ()
    %cst_16 = arith.constant dense<0.000000e+00> : vector<2x32x128xf32>
    %11 = tpu.matmul %10, %9, %cst_16 {dimension_numbers = #tpu.dot_dimension_numbers<[2], [1], [1], [2], [0, 0, 0, 1, 1, 2], [0], [0]>} : vector<2x32x8xbf16>, vector<2x8x128xbf16>, vector<2x32x128xf32> -> vector<2x32x128xf32>
    "tpu.trace_stop"() : () -> ()
    %cst_17 = arith.constant dense<0xFF800000> : vector<2x128xf32>
    %12 = vector.multi_reduction <maximumf>, %11, %cst_17 [1] : vector<2x32x128xf32> to vector<2x128xf32>
    %13 = tpu.concatenate %8, %12 in 0 : vector<2x128xf32>, vector<2x128xf32> -> vector<4x128xf32>
    %c0_18 = arith.constant 0 : index
    %c0_19 = arith.constant 0 : index
    %c0_20 = arith.constant 0 : index
    %14 = vector.load %arg6[%c0_18, %c0_19, %c0_20] : memref<2x1x128xf32, #tpu.memory_space<vmem>>, vector<2x1x128xf32>
    %15 = vector.shape_cast %14 : vector<2x1x128xf32> to vector<2x128xf32>
    %16 = vector.broadcast %4 : vector<1x128xf32> to vector<2x128xf32>
    %17 = arith.mulf %16, %15 : vector<2x128xf32>
    %c0_21 = arith.constant 0 : index
    %c0_22 = arith.constant 0 : index
    %c0_23 = arith.constant 0 : index
    %18 = vector.load %arg7[%c0_21, %c0_22, %c0_23] : memref<2x1x128xf32, #tpu.memory_space<vmem>>, vector<2x1x128xf32>
    %19 = vector.shape_cast %18 : vector<2x1x128xf32> to vector<2x128xf32>
    %20 = vector.broadcast %4 : vector<1x128xf32> to vector<2x128xf32>
    %21 = arith.mulf %20, %19 : vector<2x128xf32>
    %22 = tpu.concatenate %17, %21 in 0 : vector<2x128xf32>, vector<2x128xf32> -> vector<4x128xf32>
    %c0_24 = arith.constant 0 : index
    %c0_25 = arith.constant 0 : index
    %23 = vector.load %arg12[%c0_24, %c0_25] : memref<4x1xf32, #tpu.memory_space<vmem>>, vector<4x1xf32>
    %cst_26 = arith.constant dense<0xFF800000> : vector<4xf32>
    %24 = vector.multi_reduction <maximumf>, %13, %cst_26 [1] : vector<4x128xf32> to vector<4xf32>
    %25 = vector.shape_cast %24 : vector<4xf32> to vector<4x1xf32>
    %26 = arith.maximumf %23, %25 : vector<4x1xf32>
    %c0_27 = arith.constant 0 : index
    %c0_28 = arith.constant 0 : index
    %27 = vector.load %arg13[%c0_27, %c0_28] : memref<4x1xf32, #tpu.memory_space<vmem>>, vector<4x1xf32>
    %c0_29 = arith.constant 0 : index
    %c0_30 = arith.constant 0 : index
    %28 = vector.load %arg12[%c0_29, %c0_30] : memref<4x1xf32, #tpu.memory_space<vmem>>, vector<4x1xf32>
    %29 = arith.subf %28, %26 : vector<4x1xf32>
    %30 = math.exp %29 : vector<4x1xf32>
    %31 = arith.mulf %27, %30 : vector<4x1xf32>
    %32 = vector.broadcast %26 : vector<4x1xf32> to vector<4x128xf32>
    %33 = arith.subf %13, %32 : vector<4x128xf32>
    %34 = math.exp %33 : vector<4x128xf32>
    %cst_31 = arith.constant dense<0.000000e+00> : vector<4xf32>
    %35 = vector.multi_reduction <add>, %34, %cst_31 [1] : vector<4x128xf32> to vector<4xf32>
    %36 = vector.shape_cast %35 : vector<4xf32> to vector<4x1xf32>
    %37 = arith.addf %31, %36 : vector<4x1xf32>
    %c0_32 = arith.constant 0 : index
    %c0_33 = arith.constant 0 : index
    %38 = vector.load %arg13[%c0_32, %c0_33] : memref<4x1xf32, #tpu.memory_space<vmem>>, vector<4x1xf32>
    tpu.vector_store %arg13[%c0_32, %c0_33], %37 {strides = array<i32>} : memref<4x1xf32, #tpu.memory_space<vmem>>, vector<4x1xf32>,
    %c0_34 = arith.constant 0 : index
    %c0_35 = arith.constant 0 : index
    %39 = vector.load %arg12[%c0_34, %c0_35] : memref<4x1xf32, #tpu.memory_space<vmem>>, vector<4x1xf32>
    tpu.vector_store %arg12[%c0_34, %c0_35], %26 {strides = array<i32>} : memref<4x1xf32, #tpu.memory_space<vmem>>, vector<4x1xf32>,
    %c0_36 = arith.constant 0 : index
    %c0_37 = arith.constant 0 : index
    %40 = vector.load %arg10[%c0_36, %c0_37] : memref<4x1xf32, #tpu.memory_space<vmem>>, vector<4x1xf32>
    %cst_38 = arith.constant dense<0xFF800000> : vector<4xf32>
    %41 = vector.multi_reduction <maximumf>, %22, %cst_38 [1] : vector<4x128xf32> to vector<4xf32>
    %42 = vector.shape_cast %41 : vector<4xf32> to vector<4x1xf32>
    %43 = arith.maximumf %40, %42 : vector<4x1xf32>
    %c0_39 = arith.constant 0 : index
    %c0_40 = arith.constant 0 : index
    %44 = vector.load %arg10[%c0_39, %c0_40] : memref<4x1xf32, #tpu.memory_space<vmem>>, vector<4x1xf32>
    %45 = arith.subf %44, %43 : vector<4x1xf32>
    %46 = math.exp %45 : vector<4x1xf32>
    %47 = vector.broadcast %43 : vector<4x1xf32> to vector<4x128xf32>
    %48 = arith.subf %22, %47 : vector<4x128xf32>
    %49 = math.exp %48 : vector<4x128xf32>
    %c0_41 = arith.constant 0 : index
    %c0_42 = arith.constant 0 : index
    %50 = vector.load %arg11[%c0_41, %c0_42] : memref<4x1xf32, #tpu.memory_space<vmem>>, vector<4x1xf32>
    %51 = arith.mulf %50, %46 : vector<4x1xf32>
    %cst_43 = arith.constant dense<0.000000e+00> : vector<4xf32>
    %52 = vector.multi_reduction <add>, %49, %cst_43 [1] : vector<4x128xf32> to vector<4xf32>
    %53 = vector.shape_cast %52 : vector<4xf32> to vector<4x1xf32>
    %54 = arith.addf %51, %53 : vector<4x1xf32>
    %c0_44 = arith.constant 0 : index
    %c0_45 = arith.constant 0 : index
    %55 = vector.load %arg11[%c0_44, %c0_45] : memref<4x1xf32, #tpu.memory_space<vmem>>, vector<4x1xf32>
    tpu.vector_store %arg11[%c0_44, %c0_45], %54 {strides = array<i32>} : memref<4x1xf32, #tpu.memory_space<vmem>>, vector<4x1xf32>,
    %c0_46 = arith.constant 0 : index
    %c0_47 = arith.constant 0 : index
    %56 = vector.load %arg14[%c0_46, %c0_47] : memref<4x1xf32, #tpu.memory_space<vmem>>, vector<4x1xf32>
    %57 = arith.mulf %56, %46 : vector<4x1xf32>
    %58 = arith.subf %22, %13 : vector<4x128xf32>
    %59 = arith.mulf %49, %58 : vector<4x128xf32>
    %cst_48 = arith.constant dense<0.000000e+00> : vector<4xf32>
    %60 = vector.multi_reduction <add>, %59, %cst_48 [1] : vector<4x128xf32> to vector<4xf32>
    %61 = vector.shape_cast %60 : vector<4xf32> to vector<4x1xf32>
    %62 = arith.addf %57, %61 : vector<4x1xf32>
    %c0_49 = arith.constant 0 : index
    %c0_50 = arith.constant 0 : index
    %63 = vector.load %arg14[%c0_49, %c0_50] : memref<4x1xf32, #tpu.memory_space<vmem>>, vector<4x1xf32>
    tpu.vector_store %arg14[%c0_49, %c0_50], %62 {strides = array<i32>} : memref<4x1xf32, #tpu.memory_space<vmem>>, vector<4x1xf32>,
    %c0_51 = arith.constant 0 : index
    %c0_52 = arith.constant 0 : index
    %64 = vector.load %arg10[%c0_51, %c0_52] : memref<4x1xf32, #tpu.memory_space<vmem>>, vector<4x1xf32>
    tpu.vector_store %arg10[%c0_51, %c0_52], %43 {strides = array<i32>} : memref<4x1xf32, #tpu.memory_space<vmem>>, vector<4x1xf32>,
    %c1_i32 = arith.constant 1 : i32
    %65 = arith.cmpi eq, %arg1, %c1_i32 : i32
    %66 = arith.extui %65 : i1 to i32
    %c0_i32_53 = arith.constant 0 : i32
    %67 = arith.cmpi ne, %66, %c0_i32_53 : i32
    scf.if %67 {
      %c0_54 = arith.constant 0 : index
      %c0_55 = arith.constant 0 : index
      %68 = vector.load %arg11[%c0_54, %c0_55] : memref<4x1xf32, #tpu.memory_space<vmem>>, vector<4x1xf32>
      %c0_56 = arith.constant 0 : index
      %c0_57 = arith.constant 0 : index
      %69 = vector.load %arg14[%c0_56, %c0_57] : memref<4x1xf32, #tpu.memory_space<vmem>>, vector<4x1xf32>
      %70 = arith.divf %69, %68 : vector<4x1xf32>
      %c0_58 = arith.constant 0 : index
      %c0_59 = arith.constant 0 : index
      %71 = vector.load %arg10[%c0_58, %c0_59] : memref<4x1xf32, #tpu.memory_space<vmem>>, vector<4x1xf32>
      %72 = math.log %68 : vector<4x1xf32>
      %73 = arith.addf %71, %72 : vector<4x1xf32>
      %74 = arith.subf %70, %73 : vector<4x1xf32>
      %c0_60 = arith.constant 0 : index
      %c0_61 = arith.constant 0 : index
      %75 = vector.load %arg12[%c0_60, %c0_61] : memref<4x1xf32, #tpu.memory_space<vmem>>, vector<4x1xf32>
      %c0_62 = arith.constant 0 : index
      %c0_63 = arith.constant 0 : index
      %76 = vector.load %arg13[%c0_62, %c0_63] : memref<4x1xf32, #tpu.memory_space<vmem>>, vector<4x1xf32>
      %77 = math.log %76 : vector<4x1xf32>
      %78 = arith.addf %75, %77 : vector<4x1xf32>
      %79 = arith.addf %74, %78 : vector<4x1xf32>
      %80 = vector.shape_cast %79 : vector<4x1xf32> to vector<1x4x1xf32>
      %cst_64 = arith.constant dense<0.000000e+00> : vector<1xf32>
      %81 = vector.multi_reduction <add>, %80, %cst_64 [1, 2] : vector<1x4x1xf32> to vector<1xf32>
      %82 = vector.shape_cast %81 : vector<1xf32> to vector<1x1x1xf32>
      %83 = vector.extract %82[0, 0, 0] : f32 from vector<1x1x1xf32>
      %84 = vector.broadcast %83 : f32 to vector<8x128xf32>
      %c0_65 = arith.constant 0 : index
      %c0_66 = arith.constant 0 : index
      %c0_67 = arith.constant 0 : index
      %85 = vector.load %arg9[%c0_65, %c0_66, %c0_67] : memref<1x8x128xf32, #tpu.memory_space<vmem>>, vector<1x8x128xf32>
      %86 = vector.shape_cast %85 : vector<1x8x128xf32> to vector<8x128xf32>
      %87 = vector.shape_cast %84 : vector<8x128xf32> to vector<1x8x128xf32>
      tpu.vector_store %arg9[%c0_65, %c0_66, %c0_67], %87 {strides = array<i32>} : memref<1x8x128xf32, #tpu.memory_space<vmem>>, vector<1x8x128xf32>,
    } else {
    }
    return
  }
  func.func @transform_0(%arg0: i32, %arg1: i32) -> (i32, i32, i32) {
    %c0_i32 = arith.constant 0 : i32
    %c0_i32_0 = arith.constant 0 : i32
    %c0_i32_1 = arith.constant 0 : i32
    return %arg0, %c0_i32, %c0_i32_0 : i32, i32, i32
  }
  func.func @transform_1(%arg0: i32, %arg1: i32) -> (i32, i32, i32) {
    %c0_i32 = arith.constant 0 : i32
    %c0_i32_0 = arith.constant 0 : i32
    %c0_i32_1 = arith.constant 0 : i32
    return %arg0, %c0_i32, %c0_i32_0 : i32, i32, i32
  }
  func.func @transform_2(%arg0: i32, %arg1: i32) -> (i32, i32, i32) {
    %c0_i32 = arith.constant 0 : i32
    %c0_i32_0 = arith.constant 0 : i32
    return %arg0, %c0_i32, %arg1 : i32, i32, i32
  }
  func.func @transform_3(%arg0: i32, %arg1: i32) -> (i32, i32, i32) {
    %c0_i32 = arith.constant 0 : i32
    %c0_i32_0 = arith.constant 0 : i32
    return %arg0, %c0_i32, %arg1 : i32, i32, i32
  }
  func.func @transform_4(%arg0: i32, %arg1: i32) -> (i32, i32, i32) {
    %c0_i32 = arith.constant 0 : i32
    %c0_i32_0 = arith.constant 0 : i32
    return %arg0, %c0_i32, %arg1 : i32, i32, i32
  }
  func.func @transform_5(%arg0: i32, %arg1: i32) -> (i32, i32, i32) {
    %c0_i32 = arith.constant 0 : i32
    %c0_i32_0 = arith.constant 0 : i32
    return %arg0, %c0_i32, %arg1 : i32, i32, i32
  }
  func.func @transform_6(%arg0: i32, %arg1: i32) -> (i32, i32, i32) {
    %c0_i32 = arith.constant 0 : i32
    %c0_i32_0 = arith.constant 0 : i32
    %c0_i32_1 = arith.constant 0 : i32
    return %c0_i32, %c0_i32_0, %arg1 : i32, i32, i32
  }
  func.func @transform_7(%arg0: i32, %arg1: i32) -> (i32, i32, i32) {
    %c0_i32 = arith.constant 0 : i32
    %c0_i32_0 = arith.constant 0 : i32
    %c0_i32_1 = arith.constant 0 : i32
    return %arg0, %c0_i32, %c0_i32_0 : i32, i32, i32
  }
}

</mosaic_0001>

<llo_original>
// kernel: tpu_custom_call.1
$region0: #{tpu_custom_call.1}
  #allocation0 [shape = 'u32[]', space=smem, size = 0x4, offset = 0x4, fixed_abs, tag = 'smem constant byte address 0x4 - core index']
  #allocation1 [shape = 'u32[72,128]{1,0:T(1,128)}', space=vmem, size = 0x9000, scoped, tag = 'internal scratch']
  #allocation2 [shape = 'f32[4,1]{1,0:T(4,128)}', space=vmem, size = 0x800, scoped, tag = 'scratch operand']
  #allocation3 [shape = 'f32[4,1]{1,0:T(4,128)}', space=vmem, size = 0x800, scoped, tag = 'scratch operand']
  #allocation4 [shape = 'f32[4,1]{1,0:T(4,128)}', space=vmem, size = 0x800, scoped, tag = 'scratch operand']
  #allocation5 [shape = 'f32[4,1]{1,0:T(4,128)}', space=vmem, size = 0x800, scoped, tag = 'scratch operand']
  #allocation6 [shape = 'f32[4,1]{1,0:T(4,128)}', space=vmem, size = 0x800, scoped, tag = 'scratch operand']
  %s0 = inlined_call_operand.vmem [shape: bf16[4,32,8], index: 0, kind: input, shape index: {}]
  %s1 = inlined_call_operand.vmem [shape: bf16[4,32,8], index: 1, kind: input, shape index: {}]
  %s2 = inlined_call_operand.vmem [shape: bf16[4,8,256], index: 2, kind: input, shape index: {}]
  %s3 = inlined_call_operand.vmem [shape: bf16[4,8,256], index: 3, kind: input, shape index: {}]
  %s4 = inlined_call_operand.vmem [shape: f32[4,1,256], index: 4, kind: input, shape index: {}]
  %s5 = inlined_call_operand.vmem [shape: f32[4,1,256], index: 5, kind: input, shape index: {}]
  %s6 = inlined_call_operand.vmem [shape: f32[1,1,256], index: 6, kind: input, shape index: {}]
  %s7 = inlined_call_operand.hbm [shape: f32[2,8,128], index: 7, kind: output, shape index: {}]
  %s8 = sld [smem:[#allocation0]]
  $region219: #{tpu_custom_call.1} parent=0
    _
  %s10 = ssub.s32 1, %s8
  %s11 = scalar_select 0, %s10, %s8
  $region1: #{tpu_custom_call.1} parent=0
    #allocation7 [shape = 'u8[8192]{0}', space=vmem, size = 0x2000, scoped, tag = 'input window, operand 2']
    #allocation8 [shape = 'u8[8192]{0}', space=vmem, size = 0x2000, scoped, tag = 'input window, operand 3']
    #allocation9 [shape = 'u8[2048]{0}', space=vmem, size = 0x800, scoped, tag = 'input window, operand 4']
    #allocation10 [shape = 'u8[2048]{0}', space=vmem, size = 0x800, scoped, tag = 'input window, operand 5']
    #allocation11 [shape = 'u8[8192]{0}', space=vmem, size = 0x2000, scoped, tag = 'output window, operand 0']
    #allocation12 [shape = 's32[2]{0}', space=sflag, size = 0x8, scoped, tag = 'scoped memory for tpu_custom_call.1']
    %12 = vsyncpa [#allocation12], 0
    %s13 = scalar_lea.sflag [#allocation12], 1
    %14 = vsyncpa %s13, 0
    loop: start=0, step=1, limit=6
    $region2: #{tpu_custom_call.1} parent=1 // loop_pre_header
      _
    $region3: #{tpu_custom_call.1} parent=1 // loop_header
      %s16 = sphi 0, %s20
      %p17 = scmp.ge.s32.totalorder %s16, 6
      %s23 = sphi 0, %s35
      %s24 = sphi 0, %s31
      %s25 = sphi 0, %s23
      %s26 = sphi 0, %s24
      %s27 = sphi 0, %s25
      %s28 = sphi 0, %s26
      %s38 = sphi 0, %s40
      %s41 = sphi 0, %s38
      %s42 = sphi 0, %s41
      %s58 = sphi 0, %s42
      %s64 = sphi 0, %s66
      %s67 = sphi 0, %s64
      %s68 = sphi 0, %s67
      %s84 = sphi 0, %s68
      %s92 = sphi 0, %s94
      %s95 = sphi 0, %s92
      %s96 = sphi 0, %s95
      %s112 = sphi 0, %s96
      %s120 = sphi 0, %s122
      %s123 = sphi 0, %s120
      %s124 = sphi 0, %s123
      %s140 = sphi 0, %s124
      %s148 = sphi 0, %s150
      %s151 = sphi 0, %s148
      %s152 = sphi 0, %s151
      %s168 = sphi 0, %s152
      %s176 = sphi 0, %s178
      %s179 = sphi 0, %s176
      %s180 = sphi 0, %s179
      %s196 = sphi 0, %s180
      %s202 = sphi 0, %s204
      %s205 = sphi 0, %s202
      %s206 = sphi 0, %s205
      %s222 = sphi 0, %s206
      %s228 = sphi 0, %s230
      %s231 = sphi 0, %s228
      %s232 = sphi 0, %s231
      %s248 = sphi 0, %s232
    $region4: #{tpu_custom_call.1} parent=1 // loop_header_branch
      %19 = sbr.rel (%p17) target = $region8
    $region5: #{tpu_custom_call.1} parent=1 // loop_body
      %s21 = ssub.s32 %s16, 1
      %s22 = ssub.s32 %s16, 2
      %s29 = sadd.s32 1, %s24
      %p30 = scmp.ge.s32.totalorder %s29, 2
      %s31 = scalar_select %p30, 0, %s29
      %s32 = sadd.s32 1, %s23
      %s33 = scalar_select %p30, %s32, %s23
      %p34 = scmp.ge.s32.totalorder %s33, 2
      %s35 = scalar_select %p34, 0, %s33
      %s36 = ssub.s32 %s23, %s35
      %p37 = scmp.eq.s32.totalorder %s36, 0
      %s39 = sadd.s32 %s38, 1
      %s40 = scalar_select %p37, %s38, %s39
      %p43 = pneg %p37
      %p44 = scmp.eq.s32.totalorder %s16, 3
      %p45 = por %p43, %p44
      %p46 = scmp.ne.s32.totalorder %s38, %s41
      %p47 = scmp.eq.s32.totalorder %s16, 0
      %p48 = por %p46, %p47
      %p49 = scmp.ne.s32.totalorder %s38, %s41
      %p50 = scmp.eq.s32.totalorder %s21, 3
      %p51 = por %p49, %p50
      %p52 = scmp.ne.s32.totalorder %s41, %s42
      %p53 = scmp.eq.s32.totalorder %s21, 0
      %p54 = por %p52, %p53
      %p55 = scmp.ne.s32.totalorder %s41, %s42
      %p56 = scmp.eq.s32.totalorder %s22, 3
      %p57 = por %p55, %p56
      %p59 = scmp.ne.s32.totalorder %s42, %s58
      %p60 = scmp.eq.s32.totalorder %s22, 0
      %p61 = por %p59, %p60
      %s62 = ssub.s32 %s23, %s35
      %p63 = scmp.eq.s32.totalorder %s62, 0
      %s65 = sadd.s32 %s64, 1
      %s66 = scalar_select %p63, %s64, %s65
      %p69 = pneg %p63
      %p70 = scmp.eq.s32.totalorder %s16, 3
      %p71 = por %p69, %p70
      %p72 = scmp.ne.s32.totalorder %s64, %s67
      %p73 = scmp.eq.s32.totalorder %s16, 0
      %p74 = por %p72, %p73
      %p75 = scmp.ne.s32.totalorder %s64, %s67
      %p76 = scmp.eq.s32.totalorder %s21, 3
      %p77 = por %p75, %p76
      %p78 = scmp.ne.s32.totalorder %s67, %s68
      %p79 = scmp.eq.s32.totalorder %s21, 0
      %p80 = por %p78, %p79
      %p81 = scmp.ne.s32.totalorder %s67, %s68
      %p82 = scmp.eq.s32.totalorder %s22, 3
      %p83 = por %p81, %p82
      %p85 = scmp.ne.s32.totalorder %s68, %s84
      %p86 = scmp.eq.s32.totalorder %s22, 0
      %p87 = por %p85, %p86
      %s88 = ssub.s32 %s23, %s35
      %s89 = ssub.s32 %s24, %s31
      %s90 = sor.u32 %s88, %s89
      %p91 = scmp.eq.s32.totalorder %s90, 0
      %s93 = sadd.s32 %s92, 1
      %s94 = scalar_select %p91, %s92, %s93
      %p97 = pneg %p91
      %p98 = scmp.eq.s32.totalorder %s16, 3
      %p99 = por %p97, %p98
      %p100 = scmp.ne.s32.totalorder %s92, %s95
      %p101 = scmp.eq.s32.totalorder %s16, 0
      %p102 = por %p100, %p101
      %p103 = scmp.ne.s32.totalorder %s92, %s95
      %p104 = scmp.eq.s32.totalorder %s21, 3
      %p105 = por %p103, %p104
      %p106 = scmp.ne.s32.totalorder %s95, %s96
      %p107 = scmp.eq.s32.totalorder %s21, 0
      %p108 = por %p106, %p107
      %p109 = scmp.ne.s32.totalorder %s95, %s96
      %p110 = scmp.eq.s32.totalorder %s22, 3
      %p111 = por %p109, %p110
      %p113 = scmp.ne.s32.totalorder %s96, %s112
      %p114 = scmp.eq.s32.totalorder %s22, 0
      %p115 = por %p113, %p114
      %s116 = ssub.s32 %s23, %s35
      %s117 = ssub.s32 %s24, %s31
      %s118 = sor.u32 %s116, %s117
      %p119 = scmp.eq.s32.totalorder %s118, 0
      %s121 = sadd.s32 %s120, 1
      %s122 = scalar_select %p119, %s120, %s121
      %p125 = pneg %p119
      %p126 = scmp.eq.s32.totalorder %s16, 3
      %p127 = por %p125, %p126
      %p128 = scmp.ne.s32.totalorder %s120, %s123
      %p129 = scmp.eq.s32.totalorder %s16, 0
      %p130 = por %p128, %p129
      %p131 = scmp.ne.s32.totalorder %s120, %s123
      %p132 = scmp.eq.s32.totalorder %s21, 3
      %p133 = por %p131, %p132
      %p134 = scmp.ne.s32.totalorder %s123, %s124
      %p135 = scmp.eq.s32.totalorder %s21, 0
      %p136 = por %p134, %p135
      %p137 = scmp.ne.s32.totalorder %s123, %s124
      %p138 = scmp.eq.s32.totalorder %s22, 3
      %p139 = por %p137, %p138
      %p141 = scmp.ne.s32.totalorder %s124, %s140
      %p142 = scmp.eq.s32.totalorder %s22, 0
      %p143 = por %p141, %p142
      %s144 = ssub.s32 %s23, %s35
      %s145 = ssub.s32 %s24, %s31
      %s146 = sor.u32 %s144, %s145
      %p147 = scmp.eq.s32.totalorder %s146, 0
      %s149 = sadd.s32 %s148, 1
      %s150 = scalar_select %p147, %s148, %s149
      %p153 = pneg %p147
      %p154 = scmp.eq.s32.totalorder %s16, 3
      %p155 = por %p153, %p154
      %p156 = scmp.ne.s32.totalorder %s148, %s151
      %p157 = scmp.eq.s32.totalorder %s16, 0
      %p158 = por %p156, %p157
      %p159 = scmp.ne.s32.totalorder %s148, %s151
      %p160 = scmp.eq.s32.totalorder %s21, 3
      %p161 = por %p159, %p160
      %p162 = scmp.ne.s32.totalorder %s151, %s152
      %p163 = scmp.eq.s32.totalorder %s21, 0
      %p164 = por %p162, %p163
      %p165 = scmp.ne.s32.totalorder %s151, %s152
      %p166 = scmp.eq.s32.totalorder %s22, 3
      %p167 = por %p165, %p166
      %p169 = scmp.ne.s32.totalorder %s152, %s168
      %p170 = scmp.eq.s32.totalorder %s22, 0
      %p171 = por %p169, %p170
      %s172 = ssub.s32 %s23, %s35
      %s173 = ssub.s32 %s24, %s31
      %s174 = sor.u32 %s172, %s173
      %p175 = scmp.eq.s32.totalorder %s174, 0
      %s177 = sadd.s32 %s176, 1
      %s178 = scalar_select %p175, %s176, %s177
      %p181 = pneg %p175
      %p182 = scmp.eq.s32.totalorder %s16, 3
      %p183 = por %p181, %p182
      %p184 = scmp.ne.s32.totalorder %s176, %s179
      %p185 = scmp.eq.s32.totalorder %s16, 0
      %p186 = por %p184, %p185
      %p187 = scmp.ne.s32.totalorder %s176, %s179
      %p188 = scmp.eq.s32.totalorder %s21, 3
      %p189 = por %p187, %p188
      %p190 = scmp.ne.s32.totalorder %s179, %s180
      %p191 = scmp.eq.s32.totalorder %s21, 0
      %p192 = por %p190, %p191
      %p193 = scmp.ne.s32.totalorder %s179, %s180
      %p194 = scmp.eq.s32.totalorder %s22, 3
      %p195 = por %p193, %p194
      %p197 = scmp.ne.s32.totalorder %s180, %s196
      %p198 = scmp.eq.s32.totalorder %s22, 0
      %p199 = por %p197, %p198
      %s200 = ssub.s32 %s24, %s31
      %p201 = scmp.eq.s32.totalorder %s200, 0
      %s203 = sadd.s32 %s202, 1
      %s204 = scalar_select %p201, %s202, %s203
      %p207 = pneg %p201
      %p208 = scmp.eq.s32.totalorder %s16, 3
      %p209 = por %p207, %p208
      %p210 = scmp.ne.s32.totalorder %s202, %s205
      %p211 = scmp.eq.s32.totalorder %s16, 0
      %p212 = por %p210, %p211
      %p213 = scmp.ne.s32.totalorder %s202, %s205
      %p214 = scmp.eq.s32.totalorder %s21, 3
      %p215 = por %p213, %p214
      %p216 = scmp.ne.s32.totalorder %s205, %s206
      %p217 = scmp.eq.s32.totalorder %s21, 0
      %p218 = por %p216, %p217
      %p219 = scmp.ne.s32.totalorder %s205, %s206
      %p220 = scmp.eq.s32.totalorder %s22, 3
      %p221 = por %p219, %p220
      %p223 = scmp.ne.s32.totalorder %s206, %s222
      %p224 = scmp.eq.s32.totalorder %s22, 0
      %p225 = por %p223, %p224
      %s226 = ssub.s32 %s23, %s35
      %p227 = scmp.eq.s32.totalorder %s226, 0
      %s229 = sadd.s32 %s228, 1
      %s230 = scalar_select %p227, %s228, %s229
      %p233 = pneg %p227
      %p234 = scmp.eq.s32.totalorder %s16, 3
      %p235 = por %p233, %p234
      %p236 = scmp.ne.s32.totalorder %s228, %s231
      %p237 = scmp.eq.s32.totalorder %s16, 0
      %p238 = por %p236, %p237
      %p239 = scmp.ne.s32.totalorder %s228, %s231
      %p240 = scmp.eq.s32.totalorder %s21, 3
      %p241 = por %p239, %p240
      %p242 = scmp.ne.s32.totalorder %s231, %s232
      %p243 = scmp.eq.s32.totalorder %s21, 0
      %p244 = por %p242, %p243
      %p245 = scmp.ne.s32.totalorder %s231, %s232
      %p246 = scmp.eq.s32.totalorder %s22, 3
      %p247 = por %p245, %p246
      %p249 = scmp.ne.s32.totalorder %s232, %s248
      %p250 = scmp.eq.s32.totalorder %s22, 0
      %p251 = por %p249, %p250
      %p252 = scmp.le.s32.totalorder 1, %s16
      %p253 = scmp.lt.s32.totalorder %s16, 5
      %p254 = pnand %p252, %p253
      %p255 = pneg %p254
      // Predicated region
      $region9: #{tpu_custom_call.1} parent=5 // pred_check
        _
      $region10: #{tpu_custom_call.1} parent=5 // pred_check_branch
        %257 = sbr.rel (%p254) target = $region12
      $region11: #{tpu_custom_call.1} parent=5 // pred_region
        %s258 = ssub.s32 %s16, 1
      $region12: #{tpu_custom_call.1} parent=5 // pred_fallthru
        _
      %p259 = scmp.lt.s32.totalorder %s16, 4
      // Predicated region
      $region13: #{tpu_custom_call.1} parent=5 // pred_check
        %p260 = pneg %p259
      $region14: #{tpu_custom_call.1} parent=5 // pred_check_branch
        %262 = sbr.rel (%p260) target = $region16
      $region15: #{tpu_custom_call.1} parent=5 // pred_region
        // Predicated region
        $region17: #{tpu_custom_call.1} parent=15 // pred_check
          %p263 = pneg %p48
        $region18: #{tpu_custom_call.1} parent=15 // pred_check_branch
          %265 = sbr.rel (%p263) target = $region20
        $region19: #{tpu_custom_call.1} parent=15 // pred_region
          %s266 = smul.u32 2, %s23
          %p267 = scmp.lt.s32.totalorder %s266, 3
          %s268 = scalar_select %p267, %s266, 3
          %s269 = smul.addr %s268, 4
          %s270 = smul.addr %s269, 4
          %s271 = scalar_lea.vmem %s0, %s270
          %s272 = smul.u32 2, %s23
        $region20: #{tpu_custom_call.1} parent=15 // pred_fallthru
          _
        // Predicated region
        $region21: #{tpu_custom_call.1} parent=15 // pred_check
          %p273 = pneg %p74
        $region22: #{tpu_custom_call.1} parent=15 // pred_check_branch
          %275 = sbr.rel (%p273) target = $region24
        $region23: #{tpu_custom_call.1} parent=15 // pred_region
          %s276 = smul.u32 2, %s23
          %p277 = scmp.lt.s32.totalorder %s276, 3
          %s278 = scalar_select %p277, %s276, 3
          %s279 = smul.addr %s278, 4
          %s280 = smul.addr %s279, 4
          %s281 = scalar_lea.vmem %s1, %s280
          %s282 = smul.u32 2, %s23
        $region24: #{tpu_custom_call.1} parent=15 // pred_fallthru
          _
        // Predicated region
        $region25: #{tpu_custom_call.1} parent=15 // pred_check
          %p283 = pneg %p102
        $region26: #{tpu_custom_call.1} parent=15 // pred_check_branch
          %285 = sbr.rel (%p283) target = $region28
        $region27: #{tpu_custom_call.1} parent=15 // pred_region
          %s286 = sand.u32 %s92, 1
          %s287 = sand.u32 %s92, 1
          %s288 = smul.addr %s287, 8
          %s289 = scalar_lea.vmem [#allocation7], %s288
          %s290 = smul.u32 2, %s23
          %s291 = smul.addr %s290, 2
          %s292 = sadd.s32 %s24, %s291
          %s293 = smul.addr %s292, 4
          %s294 = scalar_lea.vmem %s2, %s293
          // Predicated region
          $region29: #{tpu_custom_call.1} parent=27 // pred_check
            _
          $region30: #{tpu_custom_call.1} parent=27 // pred_check_branch
            %296 = sbr.rel (0) target = $region32
          $region31: #{tpu_custom_call.1} parent=27 // pred_region
            // Predicated region
            $region33: #{tpu_custom_call.1} parent=31 // pred_check
              _
            $region34: #{tpu_custom_call.1} parent=31 // pred_check_branch
              %298 = sbr.rel target = $region36
            $region35: #{tpu_custom_call.1} parent=31 // pred_region
              // Predicated region
              $region48: #{tpu_custom_call.1} parent=35 // pred_check
                _
              $region49: #{tpu_custom_call.1} parent=35 // pred_check_branch
                %316 = sbr.rel (0) target = $region51
              $region50: #{tpu_custom_call.1} parent=35 // pred_region
                loop: start=0, step=1, limit=1
                $region52: #{tpu_custom_call.1} parent=50 // loop_pre_header
                  _
                $region53: #{tpu_custom_call.1} parent=50 // loop_header
                  %s318 = sphi 0, %s322
                  %p319 = scmp.ge.s32.totalorder %s318, 1
                  %s323 = sphi %s294, %s294
                  %s324 = sphi %s289, %s289
                $region54: #{tpu_custom_call.1} parent=50 // loop_header_branch
                  %321 = sbr.rel (%p319) target = $region58
                $region55: #{tpu_custom_call.1} parent=50 // loop_body
                  _
                $region56: #{tpu_custom_call.1} parent=50 // loop_footer
                  %s322 = sadd.s32 1, %s318
                $region57: #{tpu_custom_call.1} parent=50 // loop_footer_branch
                  %317 = sbr.rel target = $region53
                $region58: #{tpu_custom_call.1} parent=50 // loop_exit
                  _
                %s326 = ssub.s32 16, 1
                loop: start=0, step=1, limit=1
                $region59: #{tpu_custom_call.1} parent=50 // loop_pre_header
                  _
                $region60: #{tpu_custom_call.1} parent=50 // loop_header
                  %s328 = sphi 0, %s332
                  %p329 = scmp.ge.s32.totalorder %s328, 1
                  %s333 = sphi %s294, %s294
                  %s334 = sphi %s289, %s289
                $region61: #{tpu_custom_call.1} parent=50 // loop_header_branch
                  %331 = sbr.rel (%p329) target = $region65
                $region62: #{tpu_custom_call.1} parent=50 // loop_body
                  %v335 = vld [vmem:[%s333] sm:%s326]
                  %336 = vst [vmem:[%s334] sm:%s326] %v335
                  %v337 = vld [vmem:[%s333 + $0x8] sm:%s326]
                  %338 = vst [vmem:[%s334 + $0x4] sm:%s326] %v337
                $region63: #{tpu_custom_call.1} parent=50 // loop_footer
                  %s332 = sadd.s32 1, %s328
                $region64: #{tpu_custom_call.1} parent=50 // loop_footer_branch
                  %327 = sbr.rel target = $region60
                $region65: #{tpu_custom_call.1} parent=50 // loop_exit
                  _
              $region51: #{tpu_custom_call.1} parent=35 // pred_fallthru
                _
            $region36: #{tpu_custom_call.1} parent=31 // pred_fallthru
              _
            // Predicated region
            $region37: #{tpu_custom_call.1} parent=31 // pred_check
              _
            $region38: #{tpu_custom_call.1} parent=31 // pred_check_branch
              %300 = sbr.rel (0) target = $region40
            $region39: #{tpu_custom_call.1} parent=31 // pred_region
              %s302 = ssub.s32 16, 1
              loop: start=0, step=1, limit=1
              $region41: #{tpu_custom_call.1} parent=39 // loop_pre_header
                _
              $region42: #{tpu_custom_call.1} parent=39 // loop_header
                %s304 = sphi 0, %s308
                %p305 = scmp.ge.s32.totalorder %s304, 1
                %s309 = sphi %s294, %s294
                %s310 = sphi %s289, %s289
              $region43: #{tpu_custom_call.1} parent=39 // loop_header_branch
                %307 = sbr.rel (%p305) target = $region47
              $region44: #{tpu_custom_call.1} parent=39 // loop_body
                %v311 = vld [vmem:[%s309] sm:%s302]
                %312 = vst [vmem:[%s310] sm:%s302] %v311
                %v313 = vld [vmem:[%s309 + $0x8] sm:%s302]
                %314 = vst [vmem:[%s310 + $0x4] sm:%s302] %v313
              $region45: #{tpu_custom_call.1} parent=39 // loop_footer
                %s308 = sadd.s32 1, %s304
              $region46: #{tpu_custom_call.1} parent=39 // loop_footer_branch
                %303 = sbr.rel target = $region42
              $region47: #{tpu_custom_call.1} parent=39 // loop_exit
                _
            $region40: #{tpu_custom_call.1} parent=31 // pred_fallthru
              _
          $region32: #{tpu_custom_call.1} parent=27 // pred_fallthru
            _
          %339 = vnop
        $region28: #{tpu_custom_call.1} parent=15 // pred_fallthru
          _
        // Predicated region
        $region66: #{tpu_custom_call.1} parent=15 // pred_check
          %p340 = pneg %p130
        $region67: #{tpu_custom_call.1} parent=15 // pred_check_branch
          %342 = sbr.rel (%p340) target = $region69
        $region68: #{tpu_custom_call.1} parent=15 // pred_region
          %s343 = sand.u32 %s120, 1
          %s344 = sand.u32 %s120, 1
          %s345 = smul.addr %s344, 8
          %s346 = scalar_lea.vmem [#allocation8], %s345
          %s347 = smul.u32 2, %s23
          %s348 = smul.addr %s347, 2
          %s349 = sadd.s32 %s24, %s348
          %s350 = smul.addr %s349, 4
          %s351 = scalar_lea.vmem %s3, %s350
          // Predicated region
          $region70: #{tpu_custom_call.1} parent=68 // pred_check
            _
          $region71: #{tpu_custom_call.1} parent=68 // pred_check_branch
            %353 = sbr.rel (0) target = $region73
          $region72: #{tpu_custom_call.1} parent=68 // pred_region
            // Predicated region
            $region74: #{tpu_custom_call.1} parent=72 // pred_check
              _
            $region75: #{tpu_custom_call.1} parent=72 // pred_check_branch
              %355 = sbr.rel target = $region77
            $region76: #{tpu_custom_call.1} parent=72 // pred_region
              // Predicated region
              $region89: #{tpu_custom_call.1} parent=76 // pred_check
                _
              $region90: #{tpu_custom_call.1} parent=76 // pred_check_branch
                %373 = sbr.rel (0) target = $region92
              $region91: #{tpu_custom_call.1} parent=76 // pred_region
                loop: start=0, step=1, limit=1
                $region93: #{tpu_custom_call.1} parent=91 // loop_pre_header
                  _
                $region94: #{tpu_custom_call.1} parent=91 // loop_header
                  %s375 = sphi 0, %s379
                  %p376 = scmp.ge.s32.totalorder %s375, 1
                  %s380 = sphi %s351, %s351
                  %s381 = sphi %s346, %s346
                $region95: #{tpu_custom_call.1} parent=91 // loop_header_branch
                  %378 = sbr.rel (%p376) target = $region99
                $region96: #{tpu_custom_call.1} parent=91 // loop_body
                  _
                $region97: #{tpu_custom_call.1} parent=91 // loop_footer
                  %s379 = sadd.s32 1, %s375
                $region98: #{tpu_custom_call.1} parent=91 // loop_footer_branch
                  %374 = sbr.rel target = $region94
                $region99: #{tpu_custom_call.1} parent=91 // loop_exit
                  _
                %s383 = ssub.s32 16, 1
                loop: start=0, step=1, limit=1
                $region100: #{tpu_custom_call.1} parent=91 // loop_pre_header
                  _
                $region101: #{tpu_custom_call.1} parent=91 // loop_header
                  %s385 = sphi 0, %s389
                  %p386 = scmp.ge.s32.totalorder %s385, 1
                  %s390 = sphi %s351, %s351
                  %s391 = sphi %s346, %s346
                $region102: #{tpu_custom_call.1} parent=91 // loop_header_branch
                  %388 = sbr.rel (%p386) target = $region106
                $region103: #{tpu_custom_call.1} parent=91 // loop_body
                  %v392 = vld [vmem:[%s390] sm:%s383]
                  %393 = vst [vmem:[%s391] sm:%s383] %v392
                  %v394 = vld [vmem:[%s390 + $0x8] sm:%s383]
                  %395 = vst [vmem:[%s391 + $0x4] sm:%s383] %v394
                $region104: #{tpu_custom_call.1} parent=91 // loop_footer
                  %s389 = sadd.s32 1, %s385
                $region105: #{tpu_custom_call.1} parent=91 // loop_footer_branch
                  %384 = sbr.rel target = $region101
                $region106: #{tpu_custom_call.1} parent=91 // loop_exit
                  _
              $region92: #{tpu_custom_call.1} parent=76 // pred_fallthru
                _
            $region77: #{tpu_custom_call.1} parent=72 // pred_fallthru
              _
            // Predicated region
            $region78: #{tpu_custom_call.1} parent=72 // pred_check
              _
            $region79: #{tpu_custom_call.1} parent=72 // pred_check_branch
              %357 = sbr.rel (0) target = $region81
            $region80: #{tpu_custom_call.1} parent=72 // pred_region
              %s359 = ssub.s32 16, 1
              loop: start=0, step=1, limit=1
              $region82: #{tpu_custom_call.1} parent=80 // loop_pre_header
                _
              $region83: #{tpu_custom_call.1} parent=80 // loop_header
                %s361 = sphi 0, %s365
                %p362 = scmp.ge.s32.totalorder %s361, 1
                %s366 = sphi %s351, %s351
                %s367 = sphi %s346, %s346
              $region84: #{tpu_custom_call.1} parent=80 // loop_header_branch
                %364 = sbr.rel (%p362) target = $region88
              $region85: #{tpu_custom_call.1} parent=80 // loop_body
                %v368 = vld [vmem:[%s366] sm:%s359]
                %369 = vst [vmem:[%s367] sm:%s359] %v368
                %v370 = vld [vmem:[%s366 + $0x8] sm:%s359]
                %371 = vst [vmem:[%s367 + $0x4] sm:%s359] %v370
              $region86: #{tpu_custom_call.1} parent=80 // loop_footer
                %s365 = sadd.s32 1, %s361
              $region87: #{tpu_custom_call.1} parent=80 // loop_footer_branch
                %360 = sbr.rel target = $region83
              $region88: #{tpu_custom_call.1} parent=80 // loop_exit
                _
            $region81: #{tpu_custom_call.1} parent=72 // pred_fallthru
              _
          $region73: #{tpu_custom_call.1} parent=68 // pred_fallthru
            _
          %396 = vnop
        $region69: #{tpu_custom_call.1} parent=15 // pred_fallthru
          _
        // Predicated region
        $region107: #{tpu_custom_call.1} parent=15 // pred_check
          %p397 = pneg %p158
        $region108: #{tpu_custom_call.1} parent=15 // pred_check_branch
          %399 = sbr.rel (%p397) target = $region110
        $region109: #{tpu_custom_call.1} parent=15 // pred_region
          %s400 = sand.u32 %s148, 1
          %s401 = sand.u32 %s148, 1
          %s402 = smul.addr %s401, 2
          %s403 = scalar_lea.vmem [#allocation9], %s402
          %s404 = smul.u32 2, %s23
          %s405 = smul.addr %s404, 2
          %s406 = sadd.s32 %s24, %s405
          %s407 = scalar_lea.vmem %s4, %s406
          // Predicated region
          $region111: #{tpu_custom_call.1} parent=109 // pred_check
            _
          $region112: #{tpu_custom_call.1} parent=109 // pred_check_branch
            %409 = sbr.rel (0) target = $region114
          $region113: #{tpu_custom_call.1} parent=109 // pred_region
            // Predicated region
            $region115: #{tpu_custom_call.1} parent=113 // pred_check
              _
            $region116: #{tpu_custom_call.1} parent=113 // pred_check_branch
              %411 = sbr.rel target = $region118
            $region117: #{tpu_custom_call.1} parent=113 // pred_region
              // Predicated region
              $region130: #{tpu_custom_call.1} parent=117 // pred_check
                _
              $region131: #{tpu_custom_call.1} parent=117 // pred_check_branch
                %429 = sbr.rel (0) target = $region133
              $region132: #{tpu_custom_call.1} parent=117 // pred_region
                %s431 = ssub.s32 2, 1
                loop: start=0, step=1, limit=1
                $region134: #{tpu_custom_call.1} parent=132 // loop_pre_header
                  _
                $region135: #{tpu_custom_call.1} parent=132 // loop_header
                  %s433 = sphi 0, %s437
                  %p434 = scmp.ge.s32.totalorder %s433, 1
                  %s438 = sphi %s407, %s407
                  %s439 = sphi %s403, %s403
                $region136: #{tpu_custom_call.1} parent=132 // loop_header_branch
                  %436 = sbr.rel (%p434) target = $region140
                $region137: #{tpu_custom_call.1} parent=132 // loop_body
                  %v440 = vld [vmem:[%s438] sm:%s431]
                  %441 = vst [vmem:[%s439] sm:%s431] %v440
                  %v442 = vld [vmem:[%s438 + $0x2] sm:%s431]
                  %443 = vst [vmem:[%s439 + $0x1] sm:%s431] %v442
                $region138: #{tpu_custom_call.1} parent=132 // loop_footer
                  %s437 = sadd.s32 1, %s433
                $region139: #{tpu_custom_call.1} parent=132 // loop_footer_branch
                  %432 = sbr.rel target = $region135
                $region140: #{tpu_custom_call.1} parent=132 // loop_exit
                  _
              $region133: #{tpu_custom_call.1} parent=117 // pred_fallthru
                _
            $region118: #{tpu_custom_call.1} parent=113 // pred_fallthru
              _
            // Predicated region
            $region119: #{tpu_custom_call.1} parent=113 // pred_check
              _
            $region120: #{tpu_custom_call.1} parent=113 // pred_check_branch
              %413 = sbr.rel (0) target = $region122
            $region121: #{tpu_custom_call.1} parent=113 // pred_region
              %s415 = ssub.s32 2, 1
              loop: start=0, step=1, limit=1
              $region123: #{tpu_custom_call.1} parent=121 // loop_pre_header
                _
              $region124: #{tpu_custom_call.1} parent=121 // loop_header
                %s417 = sphi 0, %s421
                %p418 = scmp.ge.s32.totalorder %s417, 1
                %s422 = sphi %s407, %s407
                %s423 = sphi %s403, %s403
              $region125: #{tpu_custom_call.1} parent=121 // loop_header_branch
                %420 = sbr.rel (%p418) target = $region129
              $region126: #{tpu_custom_call.1} parent=121 // loop_body
                %v424 = vld [vmem:[%s422] sm:%s415]
                %425 = vst [vmem:[%s423] sm:%s415] %v424
                %v426 = vld [vmem:[%s422 + $0x2] sm:%s415]
                %427 = vst [vmem:[%s423 + $0x1] sm:%s415] %v426
              $region127: #{tpu_custom_call.1} parent=121 // loop_footer
                %s421 = sadd.s32 1, %s417
              $region128: #{tpu_custom_call.1} parent=121 // loop_footer_branch
                %416 = sbr.rel target = $region124
              $region129: #{tpu_custom_call.1} parent=121 // loop_exit
                _
            $region122: #{tpu_custom_call.1} parent=113 // pred_fallthru
              _
          $region114: #{tpu_custom_call.1} parent=109 // pred_fallthru
            _
          %444 = vnop
        $region110: #{tpu_custom_call.1} parent=15 // pred_fallthru
          _
        // Predicated region
        $region141: #{tpu_custom_call.1} parent=15 // pred_check
          %p445 = pneg %p186
        $region142: #{tpu_custom_call.1} parent=15 // pred_check_branch
          %447 = sbr.rel (%p445) target = $region144
        $region143: #{tpu_custom_call.1} parent=15 // pred_region
          %s448 = sand.u32 %s176, 1
          %s449 = sand.u32 %s176, 1
          %s450 = smul.addr %s449, 2
          %s451 = scalar_lea.vmem [#allocation10], %s450
          %s452 = smul.u32 2, %s23
          %s453 = smul.addr %s452, 2
          %s454 = sadd.s32 %s24, %s453
          %s455 = scalar_lea.vmem %s5, %s454
          // Predicated region
          $region145: #{tpu_custom_call.1} parent=143 // pred_check
            _
          $region146: #{tpu_custom_call.1} parent=143 // pred_check_branch
            %457 = sbr.rel (0) target = $region148
          $region147: #{tpu_custom_call.1} parent=143 // pred_region
            // Predicated region
            $region149: #{tpu_custom_call.1} parent=147 // pred_check
              _
            $region150: #{tpu_custom_call.1} parent=147 // pred_check_branch
              %459 = sbr.rel target = $region152
            $region151: #{tpu_custom_call.1} parent=147 // pred_region
              // Predicated region
              $region164: #{tpu_custom_call.1} parent=151 // pred_check
                _
              $region165: #{tpu_custom_call.1} parent=151 // pred_check_branch
                %477 = sbr.rel (0) target = $region167
              $region166: #{tpu_custom_call.1} parent=151 // pred_region
                %s479 = ssub.s32 2, 1
                loop: start=0, step=1, limit=1
                $region168: #{tpu_custom_call.1} parent=166 // loop_pre_header
                  _
                $region169: #{tpu_custom_call.1} parent=166 // loop_header
                  %s481 = sphi 0, %s485
                  %p482 = scmp.ge.s32.totalorder %s481, 1
                  %s486 = sphi %s455, %s455
                  %s487 = sphi %s451, %s451
                $region170: #{tpu_custom_call.1} parent=166 // loop_header_branch
                  %484 = sbr.rel (%p482) target = $region174
                $region171: #{tpu_custom_call.1} parent=166 // loop_body
                  %v488 = vld [vmem:[%s486] sm:%s479]
                  %489 = vst [vmem:[%s487] sm:%s479] %v488
                  %v490 = vld [vmem:[%s486 + $0x2] sm:%s479]
                  %491 = vst [vmem:[%s487 + $0x1] sm:%s479] %v490
                $region172: #{tpu_custom_call.1} parent=166 // loop_footer
                  %s485 = sadd.s32 1, %s481
                $region173: #{tpu_custom_call.1} parent=166 // loop_footer_branch
                  %480 = sbr.rel target = $region169
                $region174: #{tpu_custom_call.1} parent=166 // loop_exit
                  _
              $region167: #{tpu_custom_call.1} parent=151 // pred_fallthru
                _
            $region152: #{tpu_custom_call.1} parent=147 // pred_fallthru
              _
            // Predicated region
            $region153: #{tpu_custom_call.1} parent=147 // pred_check
              _
            $region154: #{tpu_custom_call.1} parent=147 // pred_check_branch
              %461 = sbr.rel (0) target = $region156
            $region155: #{tpu_custom_call.1} parent=147 // pred_region
              %s463 = ssub.s32 2, 1
              loop: start=0, step=1, limit=1
              $region157: #{tpu_custom_call.1} parent=155 // loop_pre_header
                _
              $region158: #{tpu_custom_call.1} parent=155 // loop_header
                %s465 = sphi 0, %s469
                %p466 = scmp.ge.s32.totalorder %s465, 1
                %s470 = sphi %s455, %s455
                %s471 = sphi %s451, %s451
              $region159: #{tpu_custom_call.1} parent=155 // loop_header_branch
                %468 = sbr.rel (%p466) target = $region163
              $region160: #{tpu_custom_call.1} parent=155 // loop_body
                %v472 = vld [vmem:[%s470] sm:%s463]
                %473 = vst [vmem:[%s471] sm:%s463] %v472
                %v474 = vld [vmem:[%s470 + $0x2] sm:%s463]
                %475 = vst [vmem:[%s471 + $0x1] sm:%s463] %v474
              $region161: #{tpu_custom_call.1} parent=155 // loop_footer
                %s469 = sadd.s32 1, %s465
              $region162: #{tpu_custom_call.1} parent=155 // loop_footer_branch
                %464 = sbr.rel target = $region158
              $region163: #{tpu_custom_call.1} parent=155 // loop_exit
                _
            $region156: #{tpu_custom_call.1} parent=147 // pred_fallthru
              _
          $region148: #{tpu_custom_call.1} parent=143 // pred_fallthru
            _
          %492 = vnop
        $region144: #{tpu_custom_call.1} parent=15 // pred_fallthru
          _
        // Predicated region
        $region175: #{tpu_custom_call.1} parent=15 // pred_check
          %p493 = pneg %p212
        $region176: #{tpu_custom_call.1} parent=15 // pred_check_branch
          %495 = sbr.rel (%p493) target = $region178
        $region177: #{tpu_custom_call.1} parent=15 // pred_region
          %p496 = scmp.lt.s32.totalorder %s24, 1
          %s497 = scalar_select %p496, %s24, 1
          %s498 = scalar_lea.vmem %s6, %s497
        $region178: #{tpu_custom_call.1} parent=15 // pred_fallthru
          _
      $region16: #{tpu_custom_call.1} parent=5 // pred_fallthru
        _
      %p499 = scmp.le.s32.totalorder 1, %s16
      %p500 = scmp.lt.s32.totalorder %s16, 5
      %p501 = pnand %p499, %p500
      %p502 = pneg %p501
      // Predicated region
      $region179: #{tpu_custom_call.1} parent=5 // pred_check
        _
      $region180: #{tpu_custom_call.1} parent=5 // pred_check_branch
        %504 = sbr.rel (%p501) target = $region182
      $region181: #{tpu_custom_call.1} parent=5 // pred_region
        %s505 = ssub.s32 %s16, 1
        %s506 = sand.u32 %s95, 1
        %s507 = sand.u32 %s95, 1
        %s508 = smul.addr %s507, 8
        %s509 = scalar_lea.vmem [#allocation7], %s508
        // Predicated region
        $region183: #{tpu_custom_call.1} parent=181 // pred_check
          %p510 = pneg %p108
        $region184: #{tpu_custom_call.1} parent=181 // pred_check_branch
          %512 = sbr.rel (%p510) target = $region186
        $region185: #{tpu_custom_call.1} parent=181 // pred_region
          _
        $region186: #{tpu_custom_call.1} parent=181 // pred_fallthru
          _
        %s513 = sand.u32 %s123, 1
        %s514 = sand.u32 %s123, 1
        %s515 = smul.addr %s514, 8
        %s516 = scalar_lea.vmem [#allocation8], %s515
        // Predicated region
        $region187: #{tpu_custom_call.1} parent=181 // pred_check
          %p517 = pneg %p136
        $region188: #{tpu_custom_call.1} parent=181 // pred_check_branch
          %519 = sbr.rel (%p517) target = $region190
        $region189: #{tpu_custom_call.1} parent=181 // pred_region
          _
        $region190: #{tpu_custom_call.1} parent=181 // pred_fallthru
          _
        %s520 = sand.u32 %s151, 1
        %s521 = sand.u32 %s151, 1
        %s522 = smul.addr %s521, 2
        %s523 = scalar_lea.vmem [#allocation9], %s522
        // Predicated region
        $region191: #{tpu_custom_call.1} parent=181 // pred_check
          %p524 = pneg %p164
        $region192: #{tpu_custom_call.1} parent=181 // pred_check_branch
          %526 = sbr.rel (%p524) target = $region194
        $region193: #{tpu_custom_call.1} parent=181 // pred_region
          _
        $region194: #{tpu_custom_call.1} parent=181 // pred_fallthru
          _
        %s527 = sand.u32 %s179, 1
        %s528 = sand.u32 %s179, 1
        %s529 = smul.addr %s528, 2
        %s530 = scalar_lea.vmem [#allocation10], %s529
        // Predicated region
        $region195: #{tpu_custom_call.1} parent=181 // pred_check
          %p531 = pneg %p192
        $region196: #{tpu_custom_call.1} parent=181 // pred_check_branch
          %533 = sbr.rel (%p531) target = $region198
        $region197: #{tpu_custom_call.1} parent=181 // pred_region
          _
        $region198: #{tpu_custom_call.1} parent=181 // pred_fallthru
          _
        %s534 = smul.u32 2, %s25
        %p535 = scmp.lt.s32.totalorder %s534, 3
        %s536 = scalar_select %p535, %s534, 3
        %s537 = smul.addr %s536, 4
        %s538 = smul.addr %s537, 4
        %s539 = scalar_lea.vmem %s0, %s538
        %p540 = pneg %p54
        %p541 = pneg %p51
        %s542 = smul.u32 2, %s25
        %p543 = scmp.lt.s32.totalorder %s542, 3
        %s544 = scalar_select %p543, %s542, 3
        %s545 = smul.addr %s544, 4
        %s546 = smul.addr %s545, 4
        %s547 = scalar_lea.vmem %s1, %s546
        %p548 = pneg %p80
        %p549 = pneg %p77
        %s550 = sand.u32 %s95, 1
        %s551 = sand.u32 %s95, 1
        %s552 = smul.addr %s551, 8
        %s553 = scalar_lea.vmem [#allocation7], %s552
        %p554 = pneg %p108
        %p555 = pneg %p105
        %s556 = sand.u32 %s123, 1
        %s557 = sand.u32 %s123, 1
        %s558 = smul.addr %s557, 8
        %s559 = scalar_lea.vmem [#allocation8], %s558
        %p560 = pneg %p136
        %p561 = pneg %p133
        %s562 = sand.u32 %s151, 1
        %s563 = sand.u32 %s151, 1
        %s564 = smul.addr %s563, 2
        %s565 = scalar_lea.vmem [#allocation9], %s564
        %p566 = pneg %p164
        %p567 = pneg %p161
        %s568 = sand.u32 %s179, 1
        %s569 = sand.u32 %s179, 1
        %s570 = smul.addr %s569, 2
        %s571 = scalar_lea.vmem [#allocation10], %s570
        %p572 = pneg %p192
        %p573 = pneg %p189
        %p574 = scmp.lt.s32.totalorder %s26, 1
        %s575 = scalar_select %p574, %s26, 1
        %s576 = scalar_lea.vmem %s6, %s575
        %p577 = pneg %p218
        %p578 = pneg %p215
        %p579 = pneg %p244
        %p580 = pneg %p241
        %s581 = sand.u32 %s231, 1
        %s582 = scalar_lea.sflag [#allocation12], %s581
        %s583 = sand.u32 %s231, 1
        %s584 = smul.addr %s583, 8
        %s585 = scalar_lea.vmem [#allocation11], %s584
        %s586 = smul.u32 2, %s25
        %p587 = scmp.lt.s32.totalorder %s586, 3
        %s588 = scalar_select %p587, %s586, 3
        %s589 = smul.addr %s588, 4
        %s590 = smul.addr %s589, 4
        %s591 = scalar_lea.vmem %s0, %s590
        %s592 = smul.u32 2, %s25
        %s593 = smul.u32 2, %s25
        %p594 = scmp.lt.s32.totalorder %s593, 3
        %s595 = scalar_select %p594, %s593, 3
        %s596 = smul.addr %s595, 4
        %s597 = smul.addr %s596, 4
        %s598 = scalar_lea.vmem %s1, %s597
        %s599 = smul.u32 2, %s25
        %s600 = smul.u32 2, %s25
        %s601 = smul.u32 2, %s25
        %s602 = smul.u32 2, %s25
        %s603 = smul.u32 2, %s25
        %p604 = scmp.lt.s32.totalorder %s26, 1
        %s605 = scalar_select %p604, %s26, 1
        %s606 = scalar_lea.vmem %s6, %s605
        %p608 = scmp.eq.s32.totalorder %s26, 0
        // Predicated region
        $region199: #{tpu_custom_call.1} parent=181 // pred_check
          %p609 = pneg %p608
        $region200: #{tpu_custom_call.1} parent=181 // pred_check_branch
          %611 = sbr.rel (%p609) target = $region202
        $region201: #{tpu_custom_call.1} parent=181 // pred_region
          %vm612 = vcmask 3072
          %613 = vst.msk [vmem:[#allocation2] sm:$0xf] %vm612, -inf
          %614 = vst.msk [vmem:[#allocation4] sm:$0xf] %vm612, -inf
          %615 = vst.msk [vmem:[#allocation3] sm:$0xf] %vm612, 0.0
          %616 = vst.msk [vmem:[#allocation5] sm:$0xf] %vm612, 0.0
          %617 = vst.msk [vmem:[#allocation6] sm:$0xf] %vm612, 0.0
        $region202: #{tpu_custom_call.1} parent=181 // pred_fallthru
          _
        %v618 = vld [vmem:[%s606] sm:$0x1]
        %v619 = vld [vmem:[%s509] sm:$0xf]
        %v620 = vld [vmem:[%s509 + $0x4] sm:$0xf]
        %v621 = vld [vmem:[%s591] sm:$0xf]
        %v622 = vld [vmem:[%s591 + $0x4] sm:$0xf]
        %v623 = vld [vmem:[%s591 + $0x8] sm:$0xf]
        %v624 = vld [vmem:[%s591 + $0xc] sm:$0xf]
        %v625 = vld [vmem:[%s591 + $0x10] sm:$0xf]
        %v626 = vld [vmem:[%s591 + $0x14] sm:$0xf]
        %v627 = vld [vmem:[%s591 + $0x18] sm:$0xf]
        %v628 = vld [vmem:[%s591 + $0x1c] sm:$0xf]
        %v633 = vunpack.c.l.b16 %v621
        %v634 = vunpack.c.l.b16 %v622
        %v635 = vunpack.c.l.b16 %v623
        %v636 = vunpack.c.l.b16 %v624
        %v637 = vpack.c.b16 %v634, %v633
        %v638 = vpack.c.b16 %v636, %v635
        %vm639 = vcmask 64512
        %v641 = vsel %vm639, %v637, 0
        %v644 = vsel %vm639, %v638, 0
        %vm646 = vcmask 1043456
        %v648 = vsel %vm646, %v619, 0
        %650 = vmatpush.bf16.msra.mxu0 0
        %651 = vmatpush.bf16.msra.mxu0 0
        %652 = vmatpush.bf16.msra.mxu0 0
        %653 = vmatpush.bf16.msra.mxu0 0
        %654 = vmatpush.bf16.msra.mxu0 0
        %655 = vmatpush.bf16.msra.mxu0 0
        %656 = vmatpush.bf16.msra.mxu0 0
        %657 = vmatpush.bf16.msra.mxu0 %v648
        %658 = vmatmul.bf16.gmra.mxu0 %v641
        %v659 = vpop.f32.mrf.mxu0
        %v660 = vadd.f32 0.0, %v659
        %v661 = vpop.f32.mrf.mxu0
        %v662 = vadd.f32 0.0, %v661
        %663 = vmatmul.bf16.gmra.mxu0 %v644
        %v664 = vpop.f32.mrf.mxu0
        %v665 = vadd.f32 0.0, %v664
        %v666 = vpop.f32.mrf.mxu0
        %v667 = vadd.f32 0.0, %v666
        %668 = vdwg.mxu0
        %v673 = vunpack.c.l.b16 %v625
        %v674 = vunpack.c.l.b16 %v626
        %v675 = vunpack.c.l.b16 %v627
        %v676 = vunpack.c.l.b16 %v628
        %v677 = vpack.c.b16 %v674, %v673
        %v678 = vpack.c.b16 %v676, %v675
        %v680 = vsel %vm639, %v677, 0
        %v683 = vsel %vm639, %v678, 0
        %v686 = vsel %vm646, %v620, 0
        %688 = vmatpush.bf16.msra.mxu0 0
        %689 = vmatpush.bf16.msra.mxu0 0
        %690 = vmatpush.bf16.msra.mxu0 0
        %691 = vmatpush.bf16.msra.mxu0 0
        %692 = vmatpush.bf16.msra.mxu0 0
        %693 = vmatpush.bf16.msra.mxu0 0
        %694 = vmatpush.bf16.msra.mxu0 0
        %695 = vmatpush.bf16.msra.mxu0 %v686
        %696 = vmatmul.bf16.gmra.mxu0 %v680
        %v697 = vpop.f32.mrf.mxu0
        %v698 = vadd.f32 0.0, %v697
        %v699 = vpop.f32.mrf.mxu0
        %v700 = vadd.f32 0.0, %v699
        %701 = vmatmul.bf16.gmra.mxu0 %v683
        %v702 = vpop.f32.mrf.mxu0
        %v703 = vadd.f32 0.0, %v702
        %v704 = vpop.f32.mrf.mxu0
        %v705 = vadd.f32 0.0, %v704
        %706 = vdwg.mxu0
        %v707 = vmax.f32 %v660, %v665
        %v708 = vmax.f32 %v662, %v667
        %v709 = vmax.f32 %v707, %v708
        %v710 = vrot.slane %v709, 4
        %v711 = vmax.f32 %v709, %v710
        %v712 = vrot.slane %v711, 2
        %v713 = vmax.f32 %v711, %v712
        %v714 = vrot.slane %v713, 1
        %v715 = vmax.f32 %v713, %v714
        %v716 = vmax.f32 %v698, %v703
        %v717 = vmax.f32 %v700, %v705
        %v718 = vmax.f32 %v716, %v717
        %v719 = vrot.slane %v718, 4
        %v720 = vmax.f32 %v718, %v719
        %v721 = vrot.slane %v720, 2
        %v722 = vmax.f32 %v720, %v721
        %v723 = vrot.slane %v722, 1
        %v724 = vmax.f32 %v722, %v723
        %v725 = vld [vmem:[%s516] sm:$0xf]
        %v726 = vld [vmem:[%s516 + $0x4] sm:$0xf]
        %v727 = vld [vmem:[%s598] sm:$0xf]
        %v728 = vld [vmem:[%s598 + $0x4] sm:$0xf]
        %v729 = vld [vmem:[%s598 + $0x8] sm:$0xf]
        %v730 = vld [vmem:[%s598 + $0xc] sm:$0xf]
        %v731 = vld [vmem:[%s598 + $0x10] sm:$0xf]
        %v732 = vld [vmem:[%s598 + $0x14] sm:$0xf]
        %v733 = vld [vmem:[%s598 + $0x18] sm:$0xf]
        %v734 = vld [vmem:[%s598 + $0x1c] sm:$0xf]
        %v739 = vunpack.c.l.b16 %v727
        %v740 = vunpack.c.l.b16 %v728
        %v741 = vunpack.c.l.b16 %v729
        %v742 = vunpack.c.l.b16 %v730
        %v743 = vpack.c.b16 %v740, %v739
        %v744 = vpack.c.b16 %v742, %v741
        %v746 = vsel %vm639, %v743, 0
        %v749 = vsel %vm639, %v744, 0
        %v752 = vsel %vm646, %v725, 0
        %754 = vmatpush.bf16.msra.mxu0 0
        %755 = vmatpush.bf16.msra.mxu0 0
        %756 = vmatpush.bf16.msra.mxu0 0
        %757 = vmatpush.bf16.msra.mxu0 0
        %758 = vmatpush.bf16.msra.mxu0 0
        %759 = vmatpush.bf16.msra.mxu0 0
        %760 = vmatpush.bf16.msra.mxu0 0
        %761 = vmatpush.bf16.msra.mxu0 %v752
        %762 = vmatmul.bf16.gmra.mxu0 %v746
        %v763 = vpop.f32.mrf.mxu0
        %v764 = vadd.f32 0.0, %v763
        %v765 = vpop.f32.mrf.mxu0
        %v766 = vadd.f32 0.0, %v765
        %767 = vmatmul.bf16.gmra.mxu0 %v749
        %v768 = vpop.f32.mrf.mxu0
        %v769 = vadd.f32 0.0, %v768
        %v770 = vpop.f32.mrf.mxu0
        %v771 = vadd.f32 0.0, %v770
        %772 = vdwg.mxu0
        %v777 = vunpack.c.l.b16 %v731
        %v778 = vunpack.c.l.b16 %v732
        %v779 = vunpack.c.l.b16 %v733
        %v780 = vunpack.c.l.b16 %v734
        %v781 = vpack.c.b16 %v778, %v777
        %v782 = vpack.c.b16 %v780, %v779
        %v784 = vsel %vm639, %v781, 0
        %v787 = vsel %vm639, %v782, 0
        %v790 = vsel %vm646, %v726, 0
        %792 = vmatpush.bf16.msra.mxu0 0
        %793 = vmatpush.bf16.msra.mxu0 0
        %794 = vmatpush.bf16.msra.mxu0 0
        %795 = vmatpush.bf16.msra.mxu0 0
        %796 = vmatpush.bf16.msra.mxu0 0
        %797 = vmatpush.bf16.msra.mxu0 0
        %798 = vmatpush.bf16.msra.mxu0 0
        %799 = vmatpush.bf16.msra.mxu0 %v790
        %800 = vmatmul.bf16.gmra.mxu0 %v784
        %v801 = vpop.f32.mrf.mxu0
        %v802 = vadd.f32 0.0, %v801
        %v803 = vpop.f32.mrf.mxu0
        %v804 = vadd.f32 0.0, %v803
        %805 = vmatmul.bf16.gmra.mxu0 %v787
        %v806 = vpop.f32.mrf.mxu0
        %v807 = vadd.f32 0.0, %v806
        %v808 = vpop.f32.mrf.mxu0
        %v809 = vadd.f32 0.0, %v808
        %810 = vdwg.mxu0
        %v811 = vmax.f32 %v764, %v769
        %v812 = vmax.f32 %v766, %v771
        %v813 = vmax.f32 %v811, %v812
        %v814 = vrot.slane %v813, 4
        %v815 = vmax.f32 %v813, %v814
        %v816 = vrot.slane %v815, 2
        %v817 = vmax.f32 %v815, %v816
        %v818 = vrot.slane %v817, 1
        %v819 = vmax.f32 %v817, %v818
        %v820 = vmax.f32 %v802, %v807
        %v821 = vmax.f32 %v804, %v809
        %v822 = vmax.f32 %v820, %v821
        %v823 = vrot.slane %v822, 4
        %v824 = vmax.f32 %v822, %v823
        %v825 = vrot.slane %v824, 2
        %v826 = vmax.f32 %v824, %v825
        %v827 = vrot.slane %v826, 1
        %v828 = vmax.f32 %v826, %v827
        %vm831 = vcmask 1041409
        %v832 = vsel %vm831, %v724, %v715
        %vm836 = vcmask 1043459
        %v837 = vsel %vm836, %v828, %v819
        %vm839 = vcmask 1041408
        %v840 = vsel %vm839, %v832, %v837
        %v841 = vld [vmem:[%s523] sm:$0x1]
        %v842 = vld [vmem:[%s523 + $0x1] sm:$0x1]
        %v844 = vperm.slane %v618, 0
        %848 = vst [vmem:[#allocation1] ss:$9 sm:$0xff] %v841
        %s849 = scalar_lea.vmem [#allocation1], 1
        %850 = vst [vmem:[%s849] ss:$9 sm:$0xff] %v842
        %v851 = vld [vmem:[#allocation1] sm:$0xff]
        %v853 = vmul.f32 %v844, %v851
        %v854 = vld [vmem:[%s530] sm:$0x1]
        %v855 = vld [vmem:[%s530 + $0x1] sm:$0x1]
        %858 = vst [vmem:[#allocation1] ss:$9 sm:$0xff] %v854
        %s859 = scalar_lea.vmem [#allocation1], 1
        %860 = vst [vmem:[%s859] ss:$9 sm:$0xff] %v855
        %v861 = vld [vmem:[#allocation1] sm:$0xff]
        %v863 = vmul.f32 %v844, %v861
        %v865 = vrot.slane %v863, 6
        %v867 = vsel %vm839, %v853, %v865
        %v868 = vld [vmem:[#allocation4] sm:$0xf]
        %v869 = vsel %vm646, %v840, -inf
        %870 = vmax.xlane.f32.xlu0 %v869
        %v871 = vpop.xlane.xlu0 %870
        %v872 = vmax.f32 %v868, %v871
        %v873 = vld [vmem:[#allocation5] sm:$0xf]
        %v874 = vsub.f32 %v868, %v872
        %v875 = vmul.f32 %v874, 1.442695
        %v876 = vpow.pop %v875
        %v877 = vmul.f32 %v873, %v876
        %879 = vset.pattern.permute.xlu0 0
        %880 = vperm.xlu0 %879, %v872
        %v881 = vpop.permute.xlu0 %880
        %v883 = vsub.f32 %v840, %v881
        %v884 = vmul.f32 %v883, 1.442695
        %v885 = vpow.pop %v884
        %v886 = vsel %vm646, %v885, 0.0
        %887 = vadd.xlane.f32.xlu0 %v886
        %v888 = vpop.xlane.xlu0 %887
        %v889 = vadd.f32 %v877, %v888
        %vm890 = vcmask 3072
        %891 = vst.msk [vmem:[#allocation5] sm:$0xf] %vm890, %v889
        %892 = vst.msk [vmem:[#allocation4] sm:$0xf] %vm890, %v872
        %v893 = vld [vmem:[#allocation2] sm:$0xf]
        %v894 = vsel %vm646, %v867, -inf
        %895 = vmax.xlane.f32.xlu0 %v894
        %v896 = vpop.xlane.xlu0 %895
        %v897 = vmax.f32 %v893, %v896
        %v898 = vsub.f32 %v893, %v897
        %v899 = vmul.f32 %v898, 1.442695
        %v900 = vpow.pop %v899
        %902 = vset.pattern.permute.xlu0 0
        %903 = vperm.xlu0 %902, %v897
        %v904 = vpop.permute.xlu0 %903
        %v906 = vsub.f32 %v867, %v904
        %v907 = vmul.f32 %v906, 1.442695
        %v908 = vpow.pop %v907
        %v909 = vld [vmem:[#allocation3] sm:$0xf]
        %v910 = vmul.f32 %v909, %v900
        %v911 = vsel %vm646, %v908, 0.0
        %912 = vadd.xlane.f32.xlu0 %v911
        %v913 = vpop.xlane.xlu0 %912
        %v914 = vadd.f32 %v910, %v913
        %915 = vst.msk [vmem:[#allocation3] sm:$0xf] %vm890, %v914
        %v916 = vld [vmem:[#allocation6] sm:$0xf]
        %v917 = vmul.f32 %v916, %v900
        %v918 = vsub.f32 %v867, %v840
        %v919 = vmul.f32 %v908, %v918
        %v920 = vsel %vm646, %v919, 0.0
        %921 = vadd.xlane.f32.xlu0 %v920
        %v922 = vpop.xlane.xlu0 %921
        %v923 = vadd.f32 %v917, %v922
        %924 = vst.msk [vmem:[#allocation6] sm:$0xf] %vm890, %v923
        %925 = vst.msk [vmem:[#allocation2] sm:$0xf] %vm890, %v897
        %p926 = scmp.eq.s32.totalorder %s26, 1
        // Predicated region
        $region203: #{tpu_custom_call.1} parent=181 // pred_check
          %p927 = pneg %p926
        $region204: #{tpu_custom_call.1} parent=181 // pred_check_branch
          %929 = sbr.rel (%p927) target = $region206
        $region205: #{tpu_custom_call.1} parent=181 // pred_region
          %v930 = vld [vmem:[#allocation3] sm:$0xf]
          %v931 = vld [vmem:[#allocation6] sm:$0xf]
          %v932 = vrcp.pop %v930
          %v933 = vmul.f32 %v930, %v932
          %v934 = vsub.f32 1.0, %v933
          %v935 = vmul.f32 %v932, %v934
          %v936 = vadd.f32 %v932, %v935
          %vm937 = vweird.f32 %v930
          %vm938 = vweird.f32 %v932
          %vm939 = vmor %vm937, %vm938
          %v940 = vsel %vm939, %v932, %v936
          %v941 = vand.u32 2147483647, %v930
          %vm942 = vcmp.eq.f32.partialorder %v941, 8.507059e+37
          %v943 = vand.u32 %v930, 2147483648
          %v944 = vor.u32 1.1754944e-38, %v943
          %v945 = vsel %vm942, %v944, %v940
          %v946 = vmul.f32 %v931, %v945
          %v947 = vld [vmem:[#allocation2] sm:$0xf]
          %v948 = vlog2.pop %v930
          %v949 = vmul.f32 %v948, 0.6931472
          %v950 = vadd.f32 %v947, %v949
          %v951 = vsub.f32 %v946, %v950
          %v952 = vld [vmem:[#allocation4] sm:$0xf]
          %v953 = vld [vmem:[#allocation5] sm:$0xf]
          %v954 = vlog2.pop %v953
          %v955 = vmul.f32 %v954, 0.6931472
          %v956 = vadd.f32 %v952, %v955
          %v957 = vadd.f32 %v951, %v956
          %v958 = vsel %vm890, %v957, 0.0
          %959 = vadd.xlane.f32.xlu0 %v958
          %v960 = vpop.xlane.xlu0 %959
          %v961 = vrot.slane %v960, 4
          %v962 = vadd.f32 %v960, %v961
          %v963 = vrot.slane %v962, 2
          %v964 = vadd.f32 %v962, %v963
          %v965 = vrot.slane %v964, 1
          %v966 = vadd.f32 %v964, %v965
          %s967 = vtos %v966
          %v968 = vstv %s967
          %969 = vst [vmem:[%s585] sm:$0xff] %v968
        $region206: #{tpu_custom_call.1} parent=181 // pred_fallthru
          _
        %s970 = sand.u32 %s231, 1
        %s971 = scalar_lea.sflag [#allocation12], %s970
        %s972 = sand.u32 %s231, 1
        %s973 = smul.addr %s972, 8
        %s974 = scalar_lea.vmem [#allocation11], %s973
        // Predicated region
        $region207: #{tpu_custom_call.1} parent=181 // pred_check
          %p975 = pneg %p241
        $region208: #{tpu_custom_call.1} parent=181 // pred_check_branch
          %977 = sbr.rel (%p975) target = $region210
        $region209: #{tpu_custom_call.1} parent=181 // pred_region
          %979 = vsyncadd %s971, 0
          %s980 = smul.addr %s25, 8
          %s981 = scalar_lea.hbm %s7, %s980
          %s983 = sshll.u32 %s974, 4
          %s984 = int_to_ptr.vmem [resolvable:$true] %s983
          %s985 = sshll.u32 %s981, 4
          %s986 = int_to_ptr.hbm [resolvable:$true] %s985
          %988 = dma.vmem_to_hbm [thread:$0]  %s984, 128, %s986, %s971
        $region210: #{tpu_custom_call.1} parent=181 // pred_fallthru
          _
      $region182: #{tpu_custom_call.1} parent=5 // pred_fallthru
        _
      %p989 = scmp.le.s32.totalorder 2, %s16
      // Predicated region
      $region211: #{tpu_custom_call.1} parent=5 // pred_check
        %p990 = pneg %p989
      $region212: #{tpu_custom_call.1} parent=5 // pred_check_branch
        %992 = sbr.rel (%p990) target = $region214
      $region213: #{tpu_custom_call.1} parent=5 // pred_region
        %s993 = ssub.s32 %s16, 2
        // Predicated region
        $region215: #{tpu_custom_call.1} parent=213 // pred_check
          %p994 = pneg %p247
        $region216: #{tpu_custom_call.1} parent=213 // pred_check_branch
          %996 = sbr.rel (%p994) target = $region218
        $region217: #{tpu_custom_call.1} parent=213 // pred_region
          %s997 = sand.u32 %s232, 1
          %s998 = scalar_lea.sflag [#allocation12], %s997
          %s999 = sand.u32 %s232, 1
          %s1000 = smul.addr %s999, 8
          %s1001 = scalar_lea.vmem [#allocation11], %s1000
          %1003 = dma.done %s998, 128
        $region218: #{tpu_custom_call.1} parent=213 // pred_fallthru
          _
      $region214: #{tpu_custom_call.1} parent=5 // pred_fallthru
        _
    $region6: #{tpu_custom_call.1} parent=1 // loop_footer
      %s20 = sadd.s32 1, %s16
    $region7: #{tpu_custom_call.1} parent=1 // loop_footer_branch
      %15 = sbr.rel target = $region3
    $region8: #{tpu_custom_call.1} parent=1 // loop_exit
      _
    %1004 = vsyncpa [#allocation12], 1
    %s1005 = scalar_lea.sflag [#allocation12], 1
    %1006 = vsyncpa %s1005, 1

</llo_original>
